<compile_context>
chip_gen: v6e
topology: v6e:2x2x1
jax: 0.10.0
libtpu: 0.0.40
codegen_flags: <defaults>
</compile_context>

<pallas_src>
import functools

import jax
import jax.numpy as jnp
from jax.experimental import pallas as pl
from jax.experimental.pallas import tpu as pltpu


def _round_up(x, m):
    return ((x + m - 1) // m) * m


def _pad_gate_blocks(w, h, h_pad, axis):
    """Pad each of the 3 gate blocks [r|z|n] along `axis` from h to h_pad with zeros."""
    parts = []
    for g in range(3):
        blk = jax.lax.slice_in_dim(w, g * h, (g + 1) * h, axis=axis)
        pads = [(0, 0)] * w.ndim
        pads[axis] = (0, h_pad - h)
        parts.append(jnp.pad(blk, pads))
    return jnp.concatenate(parts, axis=axis)


def _gru_block_kernel(gi_ref, h0_ref, whh_ref, bhn_ref, out_ref, h_scratch,
                      *, tt, h_pad, num_chains):
    """One grid step == `tt` GRU timesteps for one batch block.

    gi_ref : (TT, BB, 3*Hp) bf16  precomputed x_t @ W_ih^T + folded biases,
                                  gate columns [r|z|n], each padded to Hp.
    h0_ref : (BB, Hp)             initial hidden for this batch block.
    whh_ref: (Hp, 3*Hp) bf16      fused W_hh^T, resident across the grid.
    bhn_ref: (1, Hp) f32          b_hh of the n gate (must stay inside r*(...)).
    out_ref: (BB, TT, Hp)         per-step hidden outputs, batch-first.
    h_scratch: (BB, Hp) f32       hidden state carried across the time axis.
    """
    @pl.when(pl.program_id(1) == 0)
    def _():
        h_scratch[...] = h0_ref[...].astype(jnp.float32)

    Hp = h_pad
    w = whh_ref[...]                              # (Hp, 3Hp) bf16, hoisted load
    bb = h_scratch.shape[0]
    cb = bb // num_chains                         # rows per sub-chain (mult of 8)

    # Hoist the n-gate bias broadcast out of the unrolled loop.
    b_n = jnp.broadcast_to(bhn_ref[...].astype(jnp.float32), (cb, Hp))

    # Split the batch block into independent recurrence sub-chains; their
    # straight-line code interleaves in the scheduler, hiding MXU/EUP latency.
    h = h_scratch[...]
    hs = [h[c * cb:(c + 1) * cb, :] for c in range(num_chains)]

    for i in range(tt):                           # static unroll over timesteps
        gi_all = gi_ref[i].astype(jnp.float32)    # (BB, 3Hp) contiguous load
        for c in range(num_chains):
            h_c = hs[c]
            gi = gi_all[c * cb:(c + 1) * cb, :]
            gh = jnp.dot(h_c.astype(w.dtype), w,            # bf16 MXU, f32 acc
                         preferred_element_type=jnp.float32)  # (cb, 3Hp)
            r = jax.nn.sigmoid(gi[:, :Hp] + gh[:, :Hp])
            z = jax.nn.sigmoid(gi[:, Hp:2 * Hp] + gh[:, Hp:2 * Hp])
            n = jnp.tanh(gi[:, 2 * Hp:] + r * (gh[:, 2 * Hp:] + b_n))
            h_c = (1.0 - z) * n + z * h_c
            hs[c] = h_c
            # Batch-first, lane-dense (Hp % 128 == 0) store.
            out_ref[c * cb:(c + 1) * cb, i, :] = h_c.astype(out_ref.dtype)

    h_scratch[...] = jnp.concatenate(hs, axis=0) if num_chains > 1 else hs[0]


def context_rnn_forward(input_seq, params, hidden=None, *,
                        time_block=32, batch_block=None):
    """Pallas equivalent of ContextRNN.forward (num_layers=1, unidirectional GRU)."""
    B, T, H = input_seq.shape
    dtype = input_seq.dtype
    if hidden is None:
        hidden = jnp.zeros((1, B, H), dtype)         # PyTorch default h0 = 0
    h0 = hidden[0].astype(dtype)                     # (B, H)

    w_ih, w_hh = params["w_ih"], params["w_hh"]      # (3H, H), gate order [r, z, n]
    b_ih, b_hh = params["b_ih"], params["b_hh"]      # (3H,)

    # Lane-align the hidden size: every gate block is padded to Hp so gate
    # slices and stores are 128-lane aligned.  Padded h columns stay zero.
    Hp = _round_up(H, 128)

    # Fold biases: r/z take b_ih + b_hh up front; n keeps b_hh_n separate
    # because of the r * (h @ W_hh_n^T + b_hh_n) term.
    b_fold = jnp.concatenate([b_ih[:2 * H] + b_hh[:2 * H], b_ih[2 * H:]])      # (3H,)
    b_fold_p = _pad_gate_blocks(b_fold, H, Hp, axis=0)                         # (3Hp,)
    b_hh_n = jnp.pad(b_hh[2 * H:], (0, Hp - H)).reshape(1, Hp)                 # (1, Hp) f32

    # Input projection hoisted out of the recurrence: one big MXU matmul over
    # all timesteps, produced time-major; stored bf16 (half the HBM stream),
    # the kernel upcasts to f32 for the gate math.
    w_ih_p = _pad_gate_blocks(w_ih, H, Hp, axis=0)                             # (3Hp, H)
    gi = jnp.einsum("bth,gh->tbg", input_seq, w_ih_p,
                    preferred_element_type=jnp.float32)
    gi = (gi + b_fold_p[None, None, :]).astype(jnp.bfloat16)                   # (T, B, 3Hp)

    # Fused, transposed, bf16 hidden weights: h @ whh_t == h @ W_hh^T,
    # gate columns [r|z|n] padded to Hp each; zero rows for padded h columns.
    whh_t = jnp.pad(jnp.transpose(w_hh), ((0, Hp - H), (0, 0)))                # (Hp, 3H)
    whh_t = _pad_gate_blocks(whh_t, H, Hp, axis=1).astype(jnp.bfloat16)        # (Hp, 3Hp)

    # ---- tiling ----------------------------------------------------------
    B8 = _round_up(B, 8)
    if batch_block is None:
        # Fill the MXU M-dim per block (<=256 rows); larger batches get
        # multiple "parallel" blocks (lets v7x's 2nd TensorCore pick up work).
        n_bblk = max(1, -(-B8 // 256))
        BB = _round_up(-(-B8 // n_bblk), 8)
    else:
        BB = int(batch_block)
    assert BB % 8 == 0, "batch block must be sublane aligned"
    B_pad = _round_up(B8, BB)

    TT = int(max(1, min(time_block, T)))
    if TT >= T:
        TT, T_pad = T, T
    else:
        TT = max(8, (TT // 8) * 8)        # batch-first out block needs TT % 8 == 0
        T_pad = _round_up(T, TT)

    # Interleave two independent recurrence chains only when each stays
    # 8-sublane aligned.
    num_chains = 2 if (BB >= 16 and BB % 16 == 0) else 1

    # Time padding is appended AFTER the real T steps (the last valid output is
    # therefore always at time index T-1); padded rows/steps are discarded.
    gi = jnp.pad(gi, ((0, T_pad - T), (0, B_pad - B), (0, 0)))
    h0p = jnp.pad(h0, ((0, B_pad - B), (0, Hp - H)))

    grid = (B_pad // BB, T_pad // TT)     # (parallel batch blocks, sequential time)
    kernel = functools.partial(_gru_block_kernel, tt=TT, h_pad=Hp,
                               num_chains=num_chains)

    out_bth = pl.pallas_call(
        kernel,
        out_shape=jax.ShapeDtypeStruct((B_pad, T_pad, Hp), dtype),
        grid_spec=pltpu.PrefetchScalarGridSpec(
            num_scalar_prefetch=0,
            grid=grid,
            in_specs=[
                pl.BlockSpec((TT, BB, 3 * Hp), lambda b, t: (t, b, 0)),   # gi (time-major)
                pl.BlockSpec((BB, Hp), lambda b, t: (b, 0)),              # h0 block
                # Constant index_map -> never re-DMA'd across grid steps; for
                # very large H add pipeline_mode=pl.Buffered(1) to drop the
                # second VMEM buffer of this resident weight.
                pl.BlockSpec((Hp, 3 * Hp), lambda b, t: (0, 0)),          # W_hh^T (bf16)
                pl.BlockSpec((1, Hp), lambda b, t: (0, 0)),               # b_hh_n
            ],
            out_specs=pl.BlockSpec((BB, TT, Hp), lambda b, t: (b, t, 0)),
            scratch_shapes=[pltpu.VMEM((BB, Hp), jnp.float32)],           # carried h_t
        ),
        compiler_params=pltpu.CompilerParams(
            dimension_semantics=("parallel", "arbitrary"),
            vmem_limit_bytes=64 * 1024 * 1024),
    )(gi, h0p, whh_t, b_hh_n)

    # Batch-first output straight from the kernel; drop batch/time/lane padding.
    output = out_bth[:B, :T, :H]                     # (B, T, H)
    hN = output[:, T - 1, :]                         # final hidden == last valid output
    return output, hN[None]                          # (1, B, H)


def gru_reference(x, h0, params):
    """Pure-JAX f32 reference matching torch.nn.GRU semantics."""
    w_ih, w_hh = params["w_ih"], params["w_hh"]
    b_ih, b_hh = params["b_ih"], params["b_hh"]

    def step(h, x_t):
        gi = jnp.dot(x_t, w_ih.T, preferred_element_type=jnp.float32) + b_ih
        gh = jnp.dot(h, w_hh.T, preferred_element_type=jnp.float32) + b_hh
        i_r, i_z, i_n = jnp.split(gi, 3, axis=-1)
        h_r, h_z, h_n = jnp.split(gh, 3, axis=-1)
        r = jax.nn.sigmoid(i_r + h_r)
        z = jax.nn.sigmoid(i_z + h_z)
        n = jnp.tanh(i_n + r * h_n)
        h_new = (1.0 - z) * n + z * h
        return h_new, h_new

    hN, ys = jax.lax.scan(step, h0, jnp.transpose(x, (1, 0, 2)))
    return jnp.transpose(ys, (1, 0, 2)), hN[None]


def init_params(key, hidden_size):
    """Deterministic init matching PyTorch GRU shapes: U(-1/sqrt(H), 1/sqrt(H))."""
    k = 1.0 / (hidden_size ** 0.5)
    k0, k1, k2, k3 = jax.random.split(key, 4)
    return {
        "w_ih": jax.random.uniform(k0, (3 * hidden_size, hidden_size), jnp.float32, -k, k),
        "w_hh": jax.random.uniform(k1, (3 * hidden_size, hidden_size), jnp.float32, -k, k),
        "b_ih": jax.random.uniform(k2, (3 * hidden_size,), jnp.float32, -k, k),
        "b_hh": jax.random.uniform(k3, (3 * hidden_size,), jnp.float32, -k, k),
    }


if __name__ == "__main__":
    B, T, H = 2, 8, 32
    root = jax.random.PRNGKey(0)
    k_in, k_par = jax.random.split(root)

    input_seq = jax.random.normal(k_in, (B, T, H), jnp.float32)
    params = init_params(k_par, H)

    out, hidden = context_rnn_forward(input_seq, params)
    out = jax.block_until_ready(out)
    hidden = jax.block_until_ready(hidden)

    # Sanity check against a pure-JAX f32 GRU reference.  The kernel runs the
    # gi stream / W_hh in bf16 (f32 accumulation), so use a bf16-appropriate
    # tolerance.
    out_ref, hidden_ref = gru_reference(input_seq, jnp.zeros((B, H), jnp.float32), params)
    assert out.shape == (B, T, H) and hidden.shape == (1, B, H)
    assert jnp.allclose(out, out_ref, atol=2e-2, rtol=2e-2)
    assert jnp.allclose(hidden, hidden_ref, atol=2e-2, rtol=2e-2)

    print("KERNEL_OK")
</pallas_src>

<mosaic_0001>
module attributes {stable_mosaic.version = 11 : i64} {
  func.func @_gru_block_kernel(%arg0: i32, %arg1: i32, %arg2: memref<8x8x384xbf16, #tpu.memory_space<vmem>>, %arg3: memref<8x128xf32, #tpu.memory_space<vmem>>, %arg4: memref<128x384xbf16, #tpu.memory_space<vmem>>, %arg5: memref<1x128xf32, #tpu.memory_space<vmem>>, %arg6: memref<8x8x128xf32, #tpu.memory_space<vmem>>, %arg7: memref<8x128xf32, #tpu.memory_space<vmem>>) attributes {dimension_semantics = [#tpu.dimension_semantics<parallel>, #tpu.dimension_semantics<arbitrary>], iteration_bounds = array<i64: 1, 1>, scalar_prefetch = 0 : i64, scratch_operands = 1 : i64, tpu.core_type = #tpu.core_type<tc>, window_params = [{transform_indices = @transform_0, window_bounds = array<i64: 8, 8, 384>}, {transform_indices = @transform_1, window_bounds = array<i64: 8, 128>}, {pipeline_mode = #tpu.pipeline_mode<synchronous>, transform_indices = @transform_2, window_bounds = array<i64: 128, 384>}, {pipeline_mode = #tpu.pipeline_mode<synchronous>, transform_indices = @transform_3, window_bounds = array<i64: 1, 128>}, {transform_indices = @transform_4, window_bounds = array<i64: 8, 8, 128>}]} {
    %c0_i32 = arith.constant 0 : i32
    %0 = arith.cmpi eq, %arg1, %c0_i32 : i32
    %1 = arith.extui %0 : i1 to i32
    %c0_i32_0 = arith.constant 0 : i32
    %2 = arith.cmpi ne, %1, %c0_i32_0 : i32
    scf.if %2 {
      %c0_80 = arith.constant 0 : index
      %c0_81 = arith.constant 0 : index
      %289 = vector.load %arg3[%c0_80, %c0_81] : memref<8x128xf32, #tpu.memory_space<vmem>>, vector<8x128xf32>
      %c0_82 = arith.constant 0 : index
      %c0_83 = arith.constant 0 : index
      %290 = vector.load %arg7[%c0_82, %c0_83] : memref<8x128xf32, #tpu.memory_space<vmem>>, vector<8x128xf32>
      tpu.vector_store %arg7[%c0_82, %c0_83], %289 {strides = array<i32>} : memref<8x128xf32, #tpu.memory_space<vmem>>, vector<8x128xf32>,
    } else {
    }
    %c0 = arith.constant 0 : index
    %c0_1 = arith.constant 0 : index
    %3 = vector.load %arg4[%c0, %c0_1] : memref<128x384xbf16, #tpu.memory_space<vmem>>, vector<128x384xbf16>
    %c0_2 = arith.constant 0 : index
    %c0_3 = arith.constant 0 : index
    %4 = vector.load %arg5[%c0_2, %c0_3] : memref<1x128xf32, #tpu.memory_space<vmem>>, vector<1x128xf32>
    %5 = vector.shape_cast %4 : vector<1x128xf32> to vector<1x128xf32>
    %6 = vector.broadcast %5 : vector<1x128xf32> to vector<8x128xf32>
    %c0_4 = arith.constant 0 : index
    %c0_5 = arith.constant 0 : index
    %7 = vector.load %arg7[%c0_4, %c0_5] : memref<8x128xf32, #tpu.memory_space<vmem>>, vector<8x128xf32>
    %c0_6 = arith.constant 0 : index
    %c0_7 = arith.constant 0 : index
    %c0_8 = arith.constant 0 : index
    %8 = vector.load %arg2[%c0_6, %c0_7, %c0_8] : memref<8x8x384xbf16, #tpu.memory_space<vmem>>, vector<1x8x384xbf16>
    %9 = vector.shape_cast %8 : vector<1x8x384xbf16> to vector<8x384xbf16>
    %10 = arith.extf %9 : vector<8x384xbf16> to vector<8x384xf32>
    %11 = arith.truncf %7 : vector<8x128xf32> to vector<8x128xbf16>
    %cst = arith.constant dense<0.000000e+00> : vector<8x384xf32>
    %12 = tpu.matmul %11, %3, %cst {dimension_numbers = #tpu.dot_dimension_numbers<[1], [0], [0], [1], [0, 0, 1, 1], [], []>} : vector<8x128xbf16>, vector<128x384xbf16>, vector<8x384xf32> -> vector<8x384xf32>
    %13 = vector.extract_strided_slice %10 {offsets = [0, 0], sizes = [8, 128], strides = [1, 1]} : vector<8x384xf32> to vector<8x128xf32>
    %14 = vector.extract_strided_slice %12 {offsets = [0, 0], sizes = [8, 128], strides = [1, 1]} : vector<8x384xf32> to vector<8x128xf32>
    %15 = arith.addf %13, %14 : vector<8x128xf32>
    %16 = arith.negf %15 : vector<8x128xf32>
    %17 = math.exp %16 : vector<8x128xf32>
    %cst_9 = arith.constant 1.000000e+00 : f32
    %18 = vector.broadcast %cst_9 : f32 to vector<8x128xf32>
    %19 = arith.addf %18, %17 : vector<8x128xf32>
    %20 = arith.divf %18, %19 : vector<8x128xf32>
    %21 = vector.extract_strided_slice %10 {offsets = [0, 128], sizes = [8, 128], strides = [1, 1]} : vector<8x384xf32> to vector<8x128xf32>
    %22 = vector.extract_strided_slice %12 {offsets = [0, 128], sizes = [8, 128], strides = [1, 1]} : vector<8x384xf32> to vector<8x128xf32>
    %23 = arith.addf %21, %22 : vector<8x128xf32>
    %24 = arith.negf %23 : vector<8x128xf32>
    %25 = math.exp %24 : vector<8x128xf32>
    %cst_10 = arith.constant 1.000000e+00 : f32
    %26 = vector.broadcast %cst_10 : f32 to vector<8x128xf32>
    %27 = arith.addf %26, %25 : vector<8x128xf32>
    %28 = arith.divf %26, %27 : vector<8x128xf32>
    %29 = vector.extract_strided_slice %10 {offsets = [0, 256], sizes = [8, 128], strides = [1, 1]} : vector<8x384xf32> to vector<8x128xf32>
    %30 = vector.extract_strided_slice %12 {offsets = [0, 256], sizes = [8, 128], strides = [1, 1]} : vector<8x384xf32> to vector<8x128xf32>
    %31 = arith.addf %30, %6 : vector<8x128xf32>
    %32 = arith.mulf %20, %31 : vector<8x128xf32>
    %33 = arith.addf %29, %32 : vector<8x128xf32>
    %34 = math.tanh %33 : vector<8x128xf32>
    %cst_11 = arith.constant 1.000000e+00 : f32
    %35 = vector.broadcast %cst_11 : f32 to vector<8x128xf32>
    %36 = arith.subf %35, %28 : vector<8x128xf32>
    %37 = arith.mulf %36, %34 : vector<8x128xf32>
    %38 = arith.mulf %28, %7 : vector<8x128xf32>
    %39 = arith.addf %37, %38 : vector<8x128xf32>
    %c0_12 = arith.constant 0 : index
    %c0_13 = arith.constant 0 : index
    %c0_14 = arith.constant 0 : index
    %40 = vector.load %arg6[%c0_12, %c0_13, %c0_14] : memref<8x8x128xf32, #tpu.memory_space<vmem>>, vector<8x1x128xf32>
    %41 = vector.shape_cast %40 : vector<8x1x128xf32> to vector<8x128xf32>
    %42 = vector.shape_cast %39 : vector<8x128xf32> to vector<8x1x128xf32>
    tpu.vector_store %arg6[%c0_12, %c0_13, %c0_14], %42 {strides = array<i32>} : memref<8x8x128xf32, #tpu.memory_space<vmem>>, vector<8x1x128xf32>,
    %c1 = arith.constant 1 : index
    %c0_15 = arith.constant 0 : index
    %c0_16 = arith.constant 0 : index
    %43 = vector.load %arg2[%c1, %c0_15, %c0_16] : memref<8x8x384xbf16, #tpu.memory_space<vmem>>, vector<1x8x384xbf16>
    %44 = vector.shape_cast %43 : vector<1x8x384xbf16> to vector<8x384xbf16>
    %45 = arith.extf %44 : vector<8x384xbf16> to vector<8x384xf32>
    %46 = arith.truncf %39 : vector<8x128xf32> to vector<8x128xbf16>
    %cst_17 = arith.constant dense<0.000000e+00> : vector<8x384xf32>
    %47 = tpu.matmul %46, %3, %cst_17 {dimension_numbers = #tpu.dot_dimension_numbers<[1], [0], [0], [1], [0, 0, 1, 1], [], []>} : vector<8x128xbf16>, vector<128x384xbf16>, vector<8x384xf32> -> vector<8x384xf32>
    %48 = vector.extract_strided_slice %45 {offsets = [0, 0], sizes = [8, 128], strides = [1, 1]} : vector<8x384xf32> to vector<8x128xf32>
    %49 = vector.extract_strided_slice %47 {offsets = [0, 0], sizes = [8, 128], strides = [1, 1]} : vector<8x384xf32> to vector<8x128xf32>
    %50 = arith.addf %48, %49 : vector<8x128xf32>
    %51 = arith.negf %50 : vector<8x128xf32>
    %52 = math.exp %51 : vector<8x128xf32>
    %cst_18 = arith.constant 1.000000e+00 : f32
    %53 = vector.broadcast %cst_18 : f32 to vector<8x128xf32>
    %54 = arith.addf %53, %52 : vector<8x128xf32>
    %55 = arith.divf %53, %54 : vector<8x128xf32>
    %56 = vector.extract_strided_slice %45 {offsets = [0, 128], sizes = [8, 128], strides = [1, 1]} : vector<8x384xf32> to vector<8x128xf32>
    %57 = vector.extract_strided_slice %47 {offsets = [0, 128], sizes = [8, 128], strides = [1, 1]} : vector<8x384xf32> to vector<8x128xf32>
    %58 = arith.addf %56, %57 : vector<8x128xf32>
    %59 = arith.negf %58 : vector<8x128xf32>
    %60 = math.exp %59 : vector<8x128xf32>
    %cst_19 = arith.constant 1.000000e+00 : f32
    %61 = vector.broadcast %cst_19 : f32 to vector<8x128xf32>
    %62 = arith.addf %61, %60 : vector<8x128xf32>
    %63 = arith.divf %61, %62 : vector<8x128xf32>
    %64 = vector.extract_strided_slice %45 {offsets = [0, 256], sizes = [8, 128], strides = [1, 1]} : vector<8x384xf32> to vector<8x128xf32>
    %65 = vector.extract_strided_slice %47 {offsets = [0, 256], sizes = [8, 128], strides = [1, 1]} : vector<8x384xf32> to vector<8x128xf32>
    %66 = arith.addf %65, %6 : vector<8x128xf32>
    %67 = arith.mulf %55, %66 : vector<8x128xf32>
    %68 = arith.addf %64, %67 : vector<8x128xf32>
    %69 = math.tanh %68 : vector<8x128xf32>
    %cst_20 = arith.constant 1.000000e+00 : f32
    %70 = vector.broadcast %cst_20 : f32 to vector<8x128xf32>
    %71 = arith.subf %70, %63 : vector<8x128xf32>
    %72 = arith.mulf %71, %69 : vector<8x128xf32>
    %73 = arith.mulf %63, %39 : vector<8x128xf32>
    %74 = arith.addf %72, %73 : vector<8x128xf32>
    %c0_21 = arith.constant 0 : index
    %c1_22 = arith.constant 1 : index
    %c0_23 = arith.constant 0 : index
    %75 = vector.load %arg6[%c0_21, %c1_22, %c0_23] : memref<8x8x128xf32, #tpu.memory_space<vmem>>, vector<8x1x128xf32>
    %76 = vector.shape_cast %75 : vector<8x1x128xf32> to vector<8x128xf32>
    %77 = vector.shape_cast %74 : vector<8x128xf32> to vector<8x1x128xf32>
    tpu.vector_store %arg6[%c0_21, %c1_22, %c0_23], %77 {strides = array<i32>} : memref<8x8x128xf32, #tpu.memory_space<vmem>>, vector<8x1x128xf32>,
    %c2 = arith.constant 2 : index
    %c0_24 = arith.constant 0 : index
    %c0_25 = arith.constant 0 : index
    %78 = vector.load %arg2[%c2, %c0_24, %c0_25] : memref<8x8x384xbf16, #tpu.memory_space<vmem>>, vector<1x8x384xbf16>
    %79 = vector.shape_cast %78 : vector<1x8x384xbf16> to vector<8x384xbf16>
    %80 = arith.extf %79 : vector<8x384xbf16> to vector<8x384xf32>
    %81 = arith.truncf %74 : vector<8x128xf32> to vector<8x128xbf16>
    %cst_26 = arith.constant dense<0.000000e+00> : vector<8x384xf32>
    %82 = tpu.matmul %81, %3, %cst_26 {dimension_numbers = #tpu.dot_dimension_numbers<[1], [0], [0], [1], [0, 0, 1, 1], [], []>} : vector<8x128xbf16>, vector<128x384xbf16>, vector<8x384xf32> -> vector<8x384xf32>
    %83 = vector.extract_strided_slice %80 {offsets = [0, 0], sizes = [8, 128], strides = [1, 1]} : vector<8x384xf32> to vector<8x128xf32>
    %84 = vector.extract_strided_slice %82 {offsets = [0, 0], sizes = [8, 128], strides = [1, 1]} : vector<8x384xf32> to vector<8x128xf32>
    %85 = arith.addf %83, %84 : vector<8x128xf32>
    %86 = arith.negf %85 : vector<8x128xf32>
    %87 = math.exp %86 : vector<8x128xf32>
    %cst_27 = arith.constant 1.000000e+00 : f32
    %88 = vector.broadcast %cst_27 : f32 to vector<8x128xf32>
    %89 = arith.addf %88, %87 : vector<8x128xf32>
    %90 = arith.divf %88, %89 : vector<8x128xf32>
    %91 = vector.extract_strided_slice %80 {offsets = [0, 128], sizes = [8, 128], strides = [1, 1]} : vector<8x384xf32> to vector<8x128xf32>
    %92 = vector.extract_strided_slice %82 {offsets = [0, 128], sizes = [8, 128], strides = [1, 1]} : vector<8x384xf32> to vector<8x128xf32>
    %93 = arith.addf %91, %92 : vector<8x128xf32>
    %94 = arith.negf %93 : vector<8x128xf32>
    %95 = math.exp %94 : vector<8x128xf32>
    %cst_28 = arith.constant 1.000000e+00 : f32
    %96 = vector.broadcast %cst_28 : f32 to vector<8x128xf32>
    %97 = arith.addf %96, %95 : vector<8x128xf32>
    %98 = arith.divf %96, %97 : vector<8x128xf32>
    %99 = vector.extract_strided_slice %80 {offsets = [0, 256], sizes = [8, 128], strides = [1, 1]} : vector<8x384xf32> to vector<8x128xf32>
    %100 = vector.extract_strided_slice %82 {offsets = [0, 256], sizes = [8, 128], strides = [1, 1]} : vector<8x384xf32> to vector<8x128xf32>
    %101 = arith.addf %100, %6 : vector<8x128xf32>
    %102 = arith.mulf %90, %101 : vector<8x128xf32>
    %103 = arith.addf %99, %102 : vector<8x128xf32>
    %104 = math.tanh %103 : vector<8x128xf32>
    %cst_29 = arith.constant 1.000000e+00 : f32
    %105 = vector.broadcast %cst_29 : f32 to vector<8x128xf32>
    %106 = arith.subf %105, %98 : vector<8x128xf32>
    %107 = arith.mulf %106, %104 : vector<8x128xf32>
    %108 = arith.mulf %98, %74 : vector<8x128xf32>
    %109 = arith.addf %107, %108 : vector<8x128xf32>
    %c0_30 = arith.constant 0 : index
    %c2_31 = arith.constant 2 : index
    %c0_32 = arith.constant 0 : index
    %110 = vector.load %arg6[%c0_30, %c2_31, %c0_32] : memref<8x8x128xf32, #tpu.memory_space<vmem>>, vector<8x1x128xf32>
    %111 = vector.shape_cast %110 : vector<8x1x128xf32> to vector<8x128xf32>
    %112 = vector.shape_cast %109 : vector<8x128xf32> to vector<8x1x128xf32>
    tpu.vector_store %arg6[%c0_30, %c2_31, %c0_32], %112 {strides = array<i32>} : memref<8x8x128xf32, #tpu.memory_space<vmem>>, vector<8x1x128xf32>,
    %c3 = arith.constant 3 : index
    %c0_33 = arith.constant 0 : index
    %c0_34 = arith.constant 0 : index
    %113 = vector.load %arg2[%c3, %c0_33, %c0_34] : memref<8x8x384xbf16, #tpu.memory_space<vmem>>, vector<1x8x384xbf16>
    %114 = vector.shape_cast %113 : vector<1x8x384xbf16> to vector<8x384xbf16>
    %115 = arith.extf %114 : vector<8x384xbf16> to vector<8x384xf32>
    %116 = arith.truncf %109 : vector<8x128xf32> to vector<8x128xbf16>
    %cst_35 = arith.constant dense<0.000000e+00> : vector<8x384xf32>
    %117 = tpu.matmul %116, %3, %cst_35 {dimension_numbers = #tpu.dot_dimension_numbers<[1], [0], [0], [1], [0, 0, 1, 1], [], []>} : vector<8x128xbf16>, vector<128x384xbf16>, vector<8x384xf32> -> vector<8x384xf32>
    %118 = vector.extract_strided_slice %115 {offsets = [0, 0], sizes = [8, 128], strides = [1, 1]} : vector<8x384xf32> to vector<8x128xf32>
    %119 = vector.extract_strided_slice %117 {offsets = [0, 0], sizes = [8, 128], strides = [1, 1]} : vector<8x384xf32> to vector<8x128xf32>
    %120 = arith.addf %118, %119 : vector<8x128xf32>
    %121 = arith.negf %120 : vector<8x128xf32>
    %122 = math.exp %121 : vector<8x128xf32>
    %cst_36 = arith.constant 1.000000e+00 : f32
    %123 = vector.broadcast %cst_36 : f32 to vector<8x128xf32>
    %124 = arith.addf %123, %122 : vector<8x128xf32>
    %125 = arith.divf %123, %124 : vector<8x128xf32>
    %126 = vector.extract_strided_slice %115 {offsets = [0, 128], sizes = [8, 128], strides = [1, 1]} : vector<8x384xf32> to vector<8x128xf32>
    %127 = vector.extract_strided_slice %117 {offsets = [0, 128], sizes = [8, 128], strides = [1, 1]} : vector<8x384xf32> to vector<8x128xf32>
    %128 = arith.addf %126, %127 : vector<8x128xf32>
    %129 = arith.negf %128 : vector<8x128xf32>
    %130 = math.exp %129 : vector<8x128xf32>
    %cst_37 = arith.constant 1.000000e+00 : f32
    %131 = vector.broadcast %cst_37 : f32 to vector<8x128xf32>
    %132 = arith.addf %131, %130 : vector<8x128xf32>
    %133 = arith.divf %131, %132 : vector<8x128xf32>
    %134 = vector.extract_strided_slice %115 {offsets = [0, 256], sizes = [8, 128], strides = [1, 1]} : vector<8x384xf32> to vector<8x128xf32>
    %135 = vector.extract_strided_slice %117 {offsets = [0, 256], sizes = [8, 128], strides = [1, 1]} : vector<8x384xf32> to vector<8x128xf32>
    %136 = arith.addf %135, %6 : vector<8x128xf32>
    %137 = arith.mulf %125, %136 : vector<8x128xf32>
    %138 = arith.addf %134, %137 : vector<8x128xf32>
    %139 = math.tanh %138 : vector<8x128xf32>
    %cst_38 = arith.constant 1.000000e+00 : f32
    %140 = vector.broadcast %cst_38 : f32 to vector<8x128xf32>
    %141 = arith.subf %140, %133 : vector<8x128xf32>
    %142 = arith.mulf %141, %139 : vector<8x128xf32>
    %143 = arith.mulf %133, %109 : vector<8x128xf32>
    %144 = arith.addf %142, %143 : vector<8x128xf32>
    %c0_39 = arith.constant 0 : index
    %c3_40 = arith.constant 3 : index
    %c0_41 = arith.constant 0 : index
    %145 = vector.load %arg6[%c0_39, %c3_40, %c0_41] : memref<8x8x128xf32, #tpu.memory_space<vmem>>, vector<8x1x128xf32>
    %146 = vector.shape_cast %145 : vector<8x1x128xf32> to vector<8x128xf32>
    %147 = vector.shape_cast %144 : vector<8x128xf32> to vector<8x1x128xf32>
    tpu.vector_store %arg6[%c0_39, %c3_40, %c0_41], %147 {strides = array<i32>} : memref<8x8x128xf32, #tpu.memory_space<vmem>>, vector<8x1x128xf32>,
    %c4 = arith.constant 4 : index
    %c0_42 = arith.constant 0 : index
    %c0_43 = arith.constant 0 : index
    %148 = vector.load %arg2[%c4, %c0_42, %c0_43] : memref<8x8x384xbf16, #tpu.memory_space<vmem>>, vector<1x8x384xbf16>
    %149 = vector.shape_cast %148 : vector<1x8x384xbf16> to vector<8x384xbf16>
    %150 = arith.extf %149 : vector<8x384xbf16> to vector<8x384xf32>
    %151 = arith.truncf %144 : vector<8x128xf32> to vector<8x128xbf16>
    %cst_44 = arith.constant dense<0.000000e+00> : vector<8x384xf32>
    %152 = tpu.matmul %151, %3, %cst_44 {dimension_numbers = #tpu.dot_dimension_numbers<[1], [0], [0], [1], [0, 0, 1, 1], [], []>} : vector<8x128xbf16>, vector<128x384xbf16>, vector<8x384xf32> -> vector<8x384xf32>
    %153 = vector.extract_strided_slice %150 {offsets = [0, 0], sizes = [8, 128], strides = [1, 1]} : vector<8x384xf32> to vector<8x128xf32>
    %154 = vector.extract_strided_slice %152 {offsets = [0, 0], sizes = [8, 128], strides = [1, 1]} : vector<8x384xf32> to vector<8x128xf32>
    %155 = arith.addf %153, %154 : vector<8x128xf32>
    %156 = arith.negf %155 : vector<8x128xf32>
    %157 = math.exp %156 : vector<8x128xf32>
    %cst_45 = arith.constant 1.000000e+00 : f32
    %158 = vector.broadcast %cst_45 : f32 to vector<8x128xf32>
    %159 = arith.addf %158, %157 : vector<8x128xf32>
    %160 = arith.divf %158, %159 : vector<8x128xf32>
    %161 = vector.extract_strided_slice %150 {offsets = [0, 128], sizes = [8, 128], strides = [1, 1]} : vector<8x384xf32> to vector<8x128xf32>
    %162 = vector.extract_strided_slice %152 {offsets = [0, 128], sizes = [8, 128], strides = [1, 1]} : vector<8x384xf32> to vector<8x128xf32>
    %163 = arith.addf %161, %162 : vector<8x128xf32>
    %164 = arith.negf %163 : vector<8x128xf32>
    %165 = math.exp %164 : vector<8x128xf32>
    %cst_46 = arith.constant 1.000000e+00 : f32
    %166 = vector.broadcast %cst_46 : f32 to vector<8x128xf32>
    %167 = arith.addf %166, %165 : vector<8x128xf32>
    %168 = arith.divf %166, %167 : vector<8x128xf32>
    %169 = vector.extract_strided_slice %150 {offsets = [0, 256], sizes = [8, 128], strides = [1, 1]} : vector<8x384xf32> to vector<8x128xf32>
    %170 = vector.extract_strided_slice %152 {offsets = [0, 256], sizes = [8, 128], strides = [1, 1]} : vector<8x384xf32> to vector<8x128xf32>
    %171 = arith.addf %170, %6 : vector<8x128xf32>
    %172 = arith.mulf %160, %171 : vector<8x128xf32>
    %173 = arith.addf %169, %172 : vector<8x128xf32>
    %174 = math.tanh %173 : vector<8x128xf32>
    %cst_47 = arith.constant 1.000000e+00 : f32
    %175 = vector.broadcast %cst_47 : f32 to vector<8x128xf32>
    %176 = arith.subf %175, %168 : vector<8x128xf32>
    %177 = arith.mulf %176, %174 : vector<8x128xf32>
    %178 = arith.mulf %168, %144 : vector<8x128xf32>
    %179 = arith.addf %177, %178 : vector<8x128xf32>
    %c0_48 = arith.constant 0 : index
    %c4_49 = arith.constant 4 : index
    %c0_50 = arith.constant 0 : index
    %180 = vector.load %arg6[%c0_48, %c4_49, %c0_50] : memref<8x8x128xf32, #tpu.memory_space<vmem>>, vector<8x1x128xf32>
    %181 = vector.shape_cast %180 : vector<8x1x128xf32> to vector<8x128xf32>
    %182 = vector.shape_cast %179 : vector<8x128xf32> to vector<8x1x128xf32>
    tpu.vector_store %arg6[%c0_48, %c4_49, %c0_50], %182 {strides = array<i32>} : memref<8x8x128xf32, #tpu.memory_space<vmem>>, vector<8x1x128xf32>,
    %c5 = arith.constant 5 : index
    %c0_51 = arith.constant 0 : index
    %c0_52 = arith.constant 0 : index
    %183 = vector.load %arg2[%c5, %c0_51, %c0_52] : memref<8x8x384xbf16, #tpu.memory_space<vmem>>, vector<1x8x384xbf16>
    %184 = vector.shape_cast %183 : vector<1x8x384xbf16> to vector<8x384xbf16>
    %185 = arith.extf %184 : vector<8x384xbf16> to vector<8x384xf32>
    %186 = arith.truncf %179 : vector<8x128xf32> to vector<8x128xbf16>
    %cst_53 = arith.constant dense<0.000000e+00> : vector<8x384xf32>
    %187 = tpu.matmul %186, %3, %cst_53 {dimension_numbers = #tpu.dot_dimension_numbers<[1], [0], [0], [1], [0, 0, 1, 1], [], []>} : vector<8x128xbf16>, vector<128x384xbf16>, vector<8x384xf32> -> vector<8x384xf32>
    %188 = vector.extract_strided_slice %185 {offsets = [0, 0], sizes = [8, 128], strides = [1, 1]} : vector<8x384xf32> to vector<8x128xf32>
    %189 = vector.extract_strided_slice %187 {offsets = [0, 0], sizes = [8, 128], strides = [1, 1]} : vector<8x384xf32> to vector<8x128xf32>
    %190 = arith.addf %188, %189 : vector<8x128xf32>
    %191 = arith.negf %190 : vector<8x128xf32>
    %192 = math.exp %191 : vector<8x128xf32>
    %cst_54 = arith.constant 1.000000e+00 : f32
    %193 = vector.broadcast %cst_54 : f32 to vector<8x128xf32>
    %194 = arith.addf %193, %192 : vector<8x128xf32>
    %195 = arith.divf %193, %194 : vector<8x128xf32>
    %196 = vector.extract_strided_slice %185 {offsets = [0, 128], sizes = [8, 128], strides = [1, 1]} : vector<8x384xf32> to vector<8x128xf32>
    %197 = vector.extract_strided_slice %187 {offsets = [0, 128], sizes = [8, 128], strides = [1, 1]} : vector<8x384xf32> to vector<8x128xf32>
    %198 = arith.addf %196, %197 : vector<8x128xf32>
    %199 = arith.negf %198 : vector<8x128xf32>
    %200 = math.exp %199 : vector<8x128xf32>
    %cst_55 = arith.constant 1.000000e+00 : f32
    %201 = vector.broadcast %cst_55 : f32 to vector<8x128xf32>
    %202 = arith.addf %201, %200 : vector<8x128xf32>
    %203 = arith.divf %201, %202 : vector<8x128xf32>
    %204 = vector.extract_strided_slice %185 {offsets = [0, 256], sizes = [8, 128], strides = [1, 1]} : vector<8x384xf32> to vector<8x128xf32>
    %205 = vector.extract_strided_slice %187 {offsets = [0, 256], sizes = [8, 128], strides = [1, 1]} : vector<8x384xf32> to vector<8x128xf32>
    %206 = arith.addf %205, %6 : vector<8x128xf32>
    %207 = arith.mulf %195, %206 : vector<8x128xf32>
    %208 = arith.addf %204, %207 : vector<8x128xf32>
    %209 = math.tanh %208 : vector<8x128xf32>
    %cst_56 = arith.constant 1.000000e+00 : f32
    %210 = vector.broadcast %cst_56 : f32 to vector<8x128xf32>
    %211 = arith.subf %210, %203 : vector<8x128xf32>
    %212 = arith.mulf %211, %209 : vector<8x128xf32>
    %213 = arith.mulf %203, %179 : vector<8x128xf32>
    %214 = arith.addf %212, %213 : vector<8x128xf32>
    %c0_57 = arith.constant 0 : index
    %c5_58 = arith.constant 5 : index
    %c0_59 = arith.constant 0 : index
    %215 = vector.load %arg6[%c0_57, %c5_58, %c0_59] : memref<8x8x128xf32, #tpu.memory_space<vmem>>, vector<8x1x128xf32>
    %216 = vector.shape_cast %215 : vector<8x1x128xf32> to vector<8x128xf32>
    %217 = vector.shape_cast %214 : vector<8x128xf32> to vector<8x1x128xf32>
    tpu.vector_store %arg6[%c0_57, %c5_58, %c0_59], %217 {strides = array<i32>} : memref<8x8x128xf32, #tpu.memory_space<vmem>>, vector<8x1x128xf32>,
    %c6 = arith.constant 6 : index
    %c0_60 = arith.constant 0 : index
    %c0_61 = arith.constant 0 : index
    %218 = vector.load %arg2[%c6, %c0_60, %c0_61] : memref<8x8x384xbf16, #tpu.memory_space<vmem>>, vector<1x8x384xbf16>
    %219 = vector.shape_cast %218 : vector<1x8x384xbf16> to vector<8x384xbf16>
    %220 = arith.extf %219 : vector<8x384xbf16> to vector<8x384xf32>
    %221 = arith.truncf %214 : vector<8x128xf32> to vector<8x128xbf16>
    %cst_62 = arith.constant dense<0.000000e+00> : vector<8x384xf32>
    %222 = tpu.matmul %221, %3, %cst_62 {dimension_numbers = #tpu.dot_dimension_numbers<[1], [0], [0], [1], [0, 0, 1, 1], [], []>} : vector<8x128xbf16>, vector<128x384xbf16>, vector<8x384xf32> -> vector<8x384xf32>
    %223 = vector.extract_strided_slice %220 {offsets = [0, 0], sizes = [8, 128], strides = [1, 1]} : vector<8x384xf32> to vector<8x128xf32>
    %224 = vector.extract_strided_slice %222 {offsets = [0, 0], sizes = [8, 128], strides = [1, 1]} : vector<8x384xf32> to vector<8x128xf32>
    %225 = arith.addf %223, %224 : vector<8x128xf32>
    %226 = arith.negf %225 : vector<8x128xf32>
    %227 = math.exp %226 : vector<8x128xf32>
    %cst_63 = arith.constant 1.000000e+00 : f32
    %228 = vector.broadcast %cst_63 : f32 to vector<8x128xf32>
    %229 = arith.addf %228, %227 : vector<8x128xf32>
    %230 = arith.divf %228, %229 : vector<8x128xf32>
    %231 = vector.extract_strided_slice %220 {offsets = [0, 128], sizes = [8, 128], strides = [1, 1]} : vector<8x384xf32> to vector<8x128xf32>
    %232 = vector.extract_strided_slice %222 {offsets = [0, 128], sizes = [8, 128], strides = [1, 1]} : vector<8x384xf32> to vector<8x128xf32>
    %233 = arith.addf %231, %232 : vector<8x128xf32>
    %234 = arith.negf %233 : vector<8x128xf32>
    %235 = math.exp %234 : vector<8x128xf32>
    %cst_64 = arith.constant 1.000000e+00 : f32
    %236 = vector.broadcast %cst_64 : f32 to vector<8x128xf32>
    %237 = arith.addf %236, %235 : vector<8x128xf32>
    %238 = arith.divf %236, %237 : vector<8x128xf32>
    %239 = vector.extract_strided_slice %220 {offsets = [0, 256], sizes = [8, 128], strides = [1, 1]} : vector<8x384xf32> to vector<8x128xf32>
    %240 = vector.extract_strided_slice %222 {offsets = [0, 256], sizes = [8, 128], strides = [1, 1]} : vector<8x384xf32> to vector<8x128xf32>
    %241 = arith.addf %240, %6 : vector<8x128xf32>
    %242 = arith.mulf %230, %241 : vector<8x128xf32>
    %243 = arith.addf %239, %242 : vector<8x128xf32>
    %244 = math.tanh %243 : vector<8x128xf32>
    %cst_65 = arith.constant 1.000000e+00 : f32
    %245 = vector.broadcast %cst_65 : f32 to vector<8x128xf32>
    %246 = arith.subf %245, %238 : vector<8x128xf32>
    %247 = arith.mulf %246, %244 : vector<8x128xf32>
    %248 = arith.mulf %238, %214 : vector<8x128xf32>
    %249 = arith.addf %247, %248 : vector<8x128xf32>
    %c0_66 = arith.constant 0 : index
    %c6_67 = arith.constant 6 : index
    %c0_68 = arith.constant 0 : index
    %250 = vector.load %arg6[%c0_66, %c6_67, %c0_68] : memref<8x8x128xf32, #tpu.memory_space<vmem>>, vector<8x1x128xf32>
    %251 = vector.shape_cast %250 : vector<8x1x128xf32> to vector<8x128xf32>
    %252 = vector.shape_cast %249 : vector<8x128xf32> to vector<8x1x128xf32>
    tpu.vector_store %arg6[%c0_66, %c6_67, %c0_68], %252 {strides = array<i32>} : memref<8x8x128xf32, #tpu.memory_space<vmem>>, vector<8x1x128xf32>,
    %c7 = arith.constant 7 : index
    %c0_69 = arith.constant 0 : index
    %c0_70 = arith.constant 0 : index
    %253 = vector.load %arg2[%c7, %c0_69, %c0_70] : memref<8x8x384xbf16, #tpu.memory_space<vmem>>, vector<1x8x384xbf16>
    %254 = vector.shape_cast %253 : vector<1x8x384xbf16> to vector<8x384xbf16>
    %255 = arith.extf %254 : vector<8x384xbf16> to vector<8x384xf32>
    %256 = arith.truncf %249 : vector<8x128xf32> to vector<8x128xbf16>
    %cst_71 = arith.constant dense<0.000000e+00> : vector<8x384xf32>
    %257 = tpu.matmul %256, %3, %cst_71 {dimension_numbers = #tpu.dot_dimension_numbers<[1], [0], [0], [1], [0, 0, 1, 1], [], []>} : vector<8x128xbf16>, vector<128x384xbf16>, vector<8x384xf32> -> vector<8x384xf32>
    %258 = vector.extract_strided_slice %255 {offsets = [0, 0], sizes = [8, 128], strides = [1, 1]} : vector<8x384xf32> to vector<8x128xf32>
    %259 = vector.extract_strided_slice %257 {offsets = [0, 0], sizes = [8, 128], strides = [1, 1]} : vector<8x384xf32> to vector<8x128xf32>
    %260 = arith.addf %258, %259 : vector<8x128xf32>
    %261 = arith.negf %260 : vector<8x128xf32>
    %262 = math.exp %261 : vector<8x128xf32>
    %cst_72 = arith.constant 1.000000e+00 : f32
    %263 = vector.broadcast %cst_72 : f32 to vector<8x128xf32>
    %264 = arith.addf %263, %262 : vector<8x128xf32>
    %265 = arith.divf %263, %264 : vector<8x128xf32>
    %266 = vector.extract_strided_slice %255 {offsets = [0, 128], sizes = [8, 128], strides = [1, 1]} : vector<8x384xf32> to vector<8x128xf32>
    %267 = vector.extract_strided_slice %257 {offsets = [0, 128], sizes = [8, 128], strides = [1, 1]} : vector<8x384xf32> to vector<8x128xf32>
    %268 = arith.addf %266, %267 : vector<8x128xf32>
    %269 = arith.negf %268 : vector<8x128xf32>
    %270 = math.exp %269 : vector<8x128xf32>
    %cst_73 = arith.constant 1.000000e+00 : f32
    %271 = vector.broadcast %cst_73 : f32 to vector<8x128xf32>
    %272 = arith.addf %271, %270 : vector<8x128xf32>
    %273 = arith.divf %271, %272 : vector<8x128xf32>
    %274 = vector.extract_strided_slice %255 {offsets = [0, 256], sizes = [8, 128], strides = [1, 1]} : vector<8x384xf32> to vector<8x128xf32>
    %275 = vector.extract_strided_slice %257 {offsets = [0, 256], sizes = [8, 128], strides = [1, 1]} : vector<8x384xf32> to vector<8x128xf32>
    %276 = arith.addf %275, %6 : vector<8x128xf32>
    %277 = arith.mulf %265, %276 : vector<8x128xf32>
    %278 = arith.addf %274, %277 : vector<8x128xf32>
    %279 = math.tanh %278 : vector<8x128xf32>
    %cst_74 = arith.constant 1.000000e+00 : f32
    %280 = vector.broadcast %cst_74 : f32 to vector<8x128xf32>
    %281 = arith.subf %280, %273 : vector<8x128xf32>
    %282 = arith.mulf %281, %279 : vector<8x128xf32>
    %283 = arith.mulf %273, %249 : vector<8x128xf32>
    %284 = arith.addf %282, %283 : vector<8x128xf32>
    %c0_75 = arith.constant 0 : index
    %c7_76 = arith.constant 7 : index
    %c0_77 = arith.constant 0 : index
    %285 = vector.load %arg6[%c0_75, %c7_76, %c0_77] : memref<8x8x128xf32, #tpu.memory_space<vmem>>, vector<8x1x128xf32>
    %286 = vector.shape_cast %285 : vector<8x1x128xf32> to vector<8x128xf32>
    %287 = vector.shape_cast %284 : vector<8x128xf32> to vector<8x1x128xf32>
    tpu.vector_store %arg6[%c0_75, %c7_76, %c0_77], %287 {strides = array<i32>} : memref<8x8x128xf32, #tpu.memory_space<vmem>>, vector<8x1x128xf32>,
    %c0_78 = arith.constant 0 : index
    %c0_79 = arith.constant 0 : index
    %288 = vector.load %arg7[%c0_78, %c0_79] : memref<8x128xf32, #tpu.memory_space<vmem>>, vector<8x128xf32>
    tpu.vector_store %arg7[%c0_78, %c0_79], %284 {strides = array<i32>} : memref<8x128xf32, #tpu.memory_space<vmem>>, vector<8x128xf32>,
    return
  }
  func.func @transform_0(%arg0: i32, %arg1: i32) -> (i32, i32, i32) {
    %c0_i32 = arith.constant 0 : i32
    %c0_i32_0 = arith.constant 0 : i32
    return %arg1, %arg0, %c0_i32 : i32, i32, i32
  }
  func.func @transform_1(%arg0: i32, %arg1: i32) -> (i32, i32) {
    %c0_i32 = arith.constant 0 : i32
    %c0_i32_0 = arith.constant 0 : i32
    return %arg0, %c0_i32 : i32, i32
  }
  func.func @transform_2(%arg0: i32, %arg1: i32) -> (i32, i32) {
    %c0_i32 = arith.constant 0 : i32
    %c0_i32_0 = arith.constant 0 : i32
    %c0_i32_1 = arith.constant 0 : i32
    return %c0_i32, %c0_i32_0 : i32, i32
  }
  func.func @transform_3(%arg0: i32, %arg1: i32) -> (i32, i32) {
    %c0_i32 = arith.constant 0 : i32
    %c0_i32_0 = arith.constant 0 : i32
    %c0_i32_1 = arith.constant 0 : i32
    return %c0_i32, %c0_i32_0 : i32, i32
  }
  func.func @transform_4(%arg0: i32, %arg1: i32) -> (i32, i32, i32) {
    %c0_i32 = arith.constant 0 : i32
    %c0_i32_0 = arith.constant 0 : i32
    return %arg0, %arg1, %c0_i32 : i32, i32, i32
  }
}

</mosaic_0001>

<llo_original>
// kernel: tpu_custom_call.1
$region0: #{tpu_custom_call.1}
  #allocation0 [shape = 'u32[]', space=smem, size = 0x4, offset = 0x4, fixed_abs, tag = 'smem constant byte address 0x4 - core index']
  #allocation1 [shape = 'u32[144,128]{1,0:T(1,128)}', space=vmem, size = 0x12000, scoped, tag = 'internal scratch']
  #allocation2 [shape = 'f32[8,128]{1,0:T(8,128)}', space=vmem, size = 0x1000, scoped, tag = 'scratch operand']
  %s0 = inlined_call_operand.hbm [shape: bf16[8,8,384], index: 0, kind: input, shape index: {}]
  %s1 = inlined_call_operand.hbm [shape: f32[8,128], index: 1, kind: input, shape index: {}]
  %s2 = inlined_call_operand.hbm [shape: bf16[128,384], index: 2, kind: input, shape index: {}]
  %s3 = inlined_call_operand.vmem [shape: f32[1,128], index: 3, kind: input, shape index: {}]
  %s4 = inlined_call_operand.hbm [shape: f32[8,8,128], index: 4, kind: output, shape index: {}]
  %s5 = sld [smem:[#allocation0]]
  $region42: #{tpu_custom_call.1} parent=0
    _
  %s7 = ssub.s32 1, %s5
  %s8 = scalar_select 0, %s7, %s5
  $region1: #{tpu_custom_call.1} parent=0
    #allocation3 [shape = 'u8[49152]{0}', space=vmem, size = 0xc000, scoped, tag = 'input window, operand 0, single buffered']
    #allocation4 [shape = 's32[1]{0}', space=sflag, size = 0x4, scoped, tag = 'scoped memory for tpu_custom_call.1']
    #allocation5 [shape = 's32[1]{0}', space=sflag, size = 0x4, scoped, tag = 'scoped memory for tpu_custom_call.1']
    #allocation6 [shape = 'u8[4096]{0}', space=vmem, size = 0x1000, scoped, tag = 'input window, operand 1, single buffered']
    #allocation7 [shape = 's32[1]{0}', space=sflag, size = 0x4, scoped, tag = 'scoped memory for tpu_custom_call.1']
    #allocation8 [shape = 'u8[98304]{0}', space=vmem, size = 0x18000, scoped, tag = 'input window, operand 2, single buffered']
    #allocation9 [shape = 'u8[32768]{0}', space=vmem, size = 0x8000, scoped, tag = 'output window, operand 0, single buffered']
    %9 = vsyncpa [#allocation4], 0
    %10 = vsyncpa [#allocation7], 0
    %11 = vsyncpa [#allocation5], 0
    // Predicated region
    $region2: #{tpu_custom_call.1} parent=1 // pred_check
      _
    $region3: #{tpu_custom_call.1} parent=1 // pred_check_branch
      %13 = sbr.rel (0) target = $region5
    $region4: #{tpu_custom_call.1} parent=1 // pred_region
      %s15 = ssub.s32 1536, 1536
      %16 = vsyncadd [#allocation4], %s15
      %s17 = sshll.u32 [#allocation3], 4
      %s18 = int_to_ptr.vmem [resolvable:$true] %s17
      %23 = dma.hbm_to_vmem [thread:$0]  %s0, 1536, %s18, [#allocation4], 192, 192, 12
    $region5: #{tpu_custom_call.1} parent=1 // pred_fallthru
      _
    // Predicated region
    $region6: #{tpu_custom_call.1} parent=1 // pred_check
      _
    $region7: #{tpu_custom_call.1} parent=1 // pred_check_branch
      %25 = sbr.rel (0) target = $region9
    $region8: #{tpu_custom_call.1} parent=1 // pred_region
      %s27 = ssub.s32 128, 128
      %28 = vsyncadd [#allocation7], %s27
      %s30 = sshll.u32 [#allocation6], 4
      %s31 = int_to_ptr.vmem [resolvable:$true] %s30
      %33 = dma.hbm_to_vmem [thread:$0]  %s1, 128, %s31, [#allocation7]
    $region9: #{tpu_custom_call.1} parent=1 // pred_fallthru
      _
    // Predicated region
    $region10: #{tpu_custom_call.1} parent=1 // pred_check
      _
    $region11: #{tpu_custom_call.1} parent=1 // pred_check_branch
      %35 = sbr.rel (0) target = $region13
    $region12: #{tpu_custom_call.1} parent=1 // pred_region
      %s37 = ssub.s32 3072, 3072
      %38 = vsyncadd [#allocation7], %s37
      %s39 = sshll.u32 [#allocation8], 4
      %s40 = int_to_ptr.vmem [resolvable:$true] %s39
      %45 = dma.hbm_to_vmem [thread:$0]  %s2, 3072, %s40, [#allocation7], 192, 192, 12
    $region13: #{tpu_custom_call.1} parent=1 // pred_fallthru
      _
    // Predicated region
    $region14: #{tpu_custom_call.1} parent=1 // pred_check
      _
    $region15: #{tpu_custom_call.1} parent=1 // pred_check_branch
      %47 = sbr.rel (0) target = $region17
    $region16: #{tpu_custom_call.1} parent=1 // pred_region
      _
    $region17: #{tpu_custom_call.1} parent=1 // pred_fallthru
      _
    // Predicated region
    $region18: #{tpu_custom_call.1} parent=1 // pred_check
      _
    $region19: #{tpu_custom_call.1} parent=1 // pred_check_branch
      %49 = sbr.rel (0) target = $region21
    $region20: #{tpu_custom_call.1} parent=1 // pred_region
      %50 = dma.done [#allocation4], 1536
    $region21: #{tpu_custom_call.1} parent=1 // pred_fallthru
      _
    // Predicated region
    $region22: #{tpu_custom_call.1} parent=1 // pred_check
      _
    $region23: #{tpu_custom_call.1} parent=1 // pred_check_branch
      %52 = sbr.rel (0) target = $region25
    $region24: #{tpu_custom_call.1} parent=1 // pred_region
      %53 = dma.done [#allocation7], 128
    $region25: #{tpu_custom_call.1} parent=1 // pred_fallthru
      _
    // Predicated region
    $region26: #{tpu_custom_call.1} parent=1 // pred_check
      _
    $region27: #{tpu_custom_call.1} parent=1 // pred_check_branch
      %55 = sbr.rel (0) target = $region29
    $region28: #{tpu_custom_call.1} parent=1 // pred_region
      %56 = dma.done [#allocation7], 3072
    $region29: #{tpu_custom_call.1} parent=1 // pred_fallthru
      _
    %p58 = scmp.eq.s32.totalorder 0, 0
    // Predicated region
    $region30: #{tpu_custom_call.1} parent=1 // pred_check
      %p59 = pneg %p58
    $region31: #{tpu_custom_call.1} parent=1 // pred_check_branch
      %61 = sbr.rel (%p59) target = $region33
    $region32: #{tpu_custom_call.1} parent=1 // pred_region
      %v62 = vld [vmem:[#allocation6] sm:$0xff]
      %63 = vst [vmem:[#allocation2] sm:$0xff] %v62
    $region33: #{tpu_custom_call.1} parent=1 // pred_fallthru
      _
    %v64 = vld [vmem:[#allocation8] sm:$0xff]
    %v65 = vld [vmem:[#allocation8 + $0x8] sm:$0xf]
    %v66 = vld [vmem:[#allocation8 + $0xc] sm:$0xff]
    %v67 = vld [vmem:[#allocation8 + $0x14] sm:$0xf]
    %v68 = vld [vmem:[#allocation8 + $0x18] sm:$0xff]
    %v69 = vld [vmem:[#allocation8 + $0x20] sm:$0xf]
    %v70 = vld [vmem:[#allocation8 + $0x24] sm:$0xff]
    %v71 = vld [vmem:[#allocation8 + $0x2c] sm:$0xf]
    %v72 = vld [vmem:[#allocation8 + $0x30] sm:$0xff]
    %v73 = vld [vmem:[#allocation8 + $0x38] sm:$0xf]
    %v74 = vld [vmem:[#allocation8 + $0x3c] sm:$0xff]
    %v75 = vld [vmem:[#allocation8 + $0x44] sm:$0xf]
    %v76 = vld [vmem:[#allocation8 + $0x48] sm:$0xff]
    %v77 = vld [vmem:[#allocation8 + $0x50] sm:$0xf]
    %v78 = vld [vmem:[#allocation8 + $0x54] sm:$0xff]
    %v79 = vld [vmem:[#allocation8 + $0x5c] sm:$0xf]
    %v80 = vld [vmem:[#allocation8 + $0x60] sm:$0xff]
    %v81 = vld [vmem:[#allocation8 + $0x68] sm:$0xf]
    %v82 = vld [vmem:[#allocation8 + $0x6c] sm:$0xff]
    %v83 = vld [vmem:[#allocation8 + $0x74] sm:$0xf]
    %v84 = vld [vmem:[#allocation8 + $0x78] sm:$0xff]
    %v85 = vld [vmem:[#allocation8 + $0x80] sm:$0xf]
    %v86 = vld [vmem:[#allocation8 + $0x84] sm:$0xff]
    %v87 = vld [vmem:[#allocation8 + $0x8c] sm:$0xf]
    %v88 = vld [vmem:[#allocation8 + $0x90] sm:$0xff]
    %v89 = vld [vmem:[#allocation8 + $0x98] sm:$0xf]
    %v90 = vld [vmem:[#allocation8 + $0x9c] sm:$0xff]
    %v91 = vld [vmem:[#allocation8 + $0xa4] sm:$0xf]
    %v92 = vld [vmem:[#allocation8 + $0xa8] sm:$0xff]
    %v93 = vld [vmem:[#allocation8 + $0xb0] sm:$0xf]
    %v94 = vld [vmem:[#allocation8 + $0xb4] sm:$0xff]
    %v95 = vld [vmem:[#allocation8 + $0xbc] sm:$0xf]
    %v96 = vld [vmem:[%s3] sm:$0x1]
    %v98 = vlaneseq
    %v99 = vshrl.u32 %v98, 7
    %v100 = vsub.s32 0, %v99
    %v101 = vrot.slane %v96, %v100
    %v103 = vld [vmem:[#allocation2] sm:$0xff]
    %v104 = vld [vmem:[#allocation3] sm:$0xff]
    %v105 = vld [vmem:[#allocation3 + $0x8] sm:$0xf]
    %v106 = vunpack.c.l.bf16 %v104
    %v107 = vunpack.c.h.bf16 %v104
    %v108 = vunpack.c.l.bf16 %v105
    %v109 = vpack.c.bf16 %v103, %v103
    %v142 = vunpack.c.l.b16 %v64
    %v143 = vunpack.c.h.b16 %v64
    %v144 = vunpack.c.l.b16 %v65
    %v145 = vunpack.c.l.b16 %v66
    %v146 = vunpack.c.h.b16 %v66
    %v147 = vunpack.c.l.b16 %v67
    %v148 = vunpack.c.l.b16 %v68
    %v149 = vunpack.c.h.b16 %v68
    %v150 = vunpack.c.l.b16 %v69
    %v151 = vunpack.c.l.b16 %v70
    %v152 = vunpack.c.h.b16 %v70
    %v153 = vunpack.c.l.b16 %v71
    %v154 = vunpack.c.l.b16 %v72
    %v155 = vunpack.c.h.b16 %v72
    %v156 = vunpack.c.l.b16 %v73
    %v157 = vunpack.c.l.b16 %v74
    %v158 = vunpack.c.h.b16 %v74
    %v159 = vunpack.c.l.b16 %v75
    %v160 = vunpack.c.l.b16 %v76
    %v161 = vunpack.c.h.b16 %v76
    %v162 = vunpack.c.l.b16 %v77
    %v163 = vunpack.c.l.b16 %v78
    %v164 = vunpack.c.h.b16 %v78
    %v165 = vunpack.c.l.b16 %v79
    %v166 = vunpack.c.l.b16 %v80
    %v167 = vunpack.c.h.b16 %v80
    %v168 = vunpack.c.l.b16 %v81
    %v169 = vunpack.c.l.b16 %v82
    %v170 = vunpack.c.h.b16 %v82
    %v171 = vunpack.c.l.b16 %v83
    %v172 = vunpack.c.l.b16 %v84
    %v173 = vunpack.c.h.b16 %v84
    %v174 = vunpack.c.l.b16 %v85
    %v175 = vunpack.c.l.b16 %v86
    %v176 = vunpack.c.h.b16 %v86
    %v177 = vunpack.c.l.b16 %v87
    %v178 = vunpack.c.l.b16 %v88
    %v179 = vunpack.c.h.b16 %v88
    %v180 = vunpack.c.l.b16 %v89
    %v181 = vunpack.c.l.b16 %v90
    %v182 = vunpack.c.h.b16 %v90
    %v183 = vunpack.c.l.b16 %v91
    %v184 = vunpack.c.l.b16 %v92
    %v185 = vunpack.c.h.b16 %v92
    %v186 = vunpack.c.l.b16 %v93
    %v187 = vunpack.c.l.b16 %v94
    %v188 = vunpack.c.h.b16 %v94
    %v189 = vunpack.c.l.b16 %v95
    %v190 = vpack.c.b16 %v145, %v142
    %v191 = vpack.c.b16 %v146, %v143
    %v192 = vpack.c.b16 %v147, %v144
    %v193 = vpack.c.b16 %v151, %v148
    %v194 = vpack.c.b16 %v152, %v149
    %v195 = vpack.c.b16 %v153, %v150
    %v196 = vpack.c.b16 %v157, %v154
    %v197 = vpack.c.b16 %v158, %v155
    %v198 = vpack.c.b16 %v159, %v156
    %v199 = vpack.c.b16 %v163, %v160
    %v200 = vpack.c.b16 %v164, %v161
    %v201 = vpack.c.b16 %v165, %v162
    %v202 = vpack.c.b16 %v169, %v166
    %v203 = vpack.c.b16 %v170, %v167
    %v204 = vpack.c.b16 %v171, %v168
    %v205 = vpack.c.b16 %v175, %v172
    %v206 = vpack.c.b16 %v176, %v173
    %v207 = vpack.c.b16 %v177, %v174
    %v208 = vpack.c.b16 %v181, %v178
    %v209 = vpack.c.b16 %v182, %v179
    %v210 = vpack.c.b16 %v183, %v180
    %v211 = vpack.c.b16 %v187, %v184
    %v212 = vpack.c.b16 %v188, %v185
    %v213 = vpack.c.b16 %v189, %v186
    %238 = vmatprep.subr.bf16.mxu0 %v212
    %239 = vmatpush1.bf16.msra.mxu0 %v211
    %240 = vmatprep.subr.bf16.mxu0 %v209
    %241 = vmatpush1.bf16.msra.mxu0 %v208
    %242 = vmatprep.subr.bf16.mxu0 %v206
    %243 = vmatpush1.bf16.msra.mxu0 %v205
    %244 = vmatprep.subr.bf16.mxu0 %v203
    %245 = vmatpush1.bf16.msra.mxu0 %v202
    %246 = vmatprep.subr.bf16.mxu0 %v200
    %247 = vmatpush1.bf16.msra.mxu0 %v199
    %248 = vmatprep.subr.bf16.mxu0 %v197
    %249 = vmatpush1.bf16.msra.mxu0 %v196
    %250 = vmatprep.subr.bf16.mxu0 %v194
    %251 = vmatpush1.bf16.msra.mxu0 %v193
    %252 = vmatprep.subr.bf16.mxu0 %v191
    %253 = vmatpush1.bf16.msra.mxu0 %v190
    %254 = vmatprep.subr.bf16.mxu0 0
    %255 = vmatpush2.bf16.msra.mxu0 0
    %256 = vmatprep.subr.bf16.mxu0 0
    %257 = vmatpush2.bf16.msra.mxu0 0
    %258 = vmatprep.subr.bf16.mxu0 0
    %259 = vmatpush2.bf16.msra.mxu0 0
    %260 = vmatprep.subr.bf16.mxu0 0
    %261 = vmatpush2.bf16.msra.mxu0 0
    %262 = vmatprep.subr.bf16.mxu0 0
    %263 = vmatpush2.bf16.msra.mxu0 0
    %264 = vmatprep.subr.bf16.mxu0 0
    %265 = vmatpush2.bf16.msra.mxu0 0
    %266 = vmatprep.subr.bf16.mxu0 0
    %267 = vmatpush2.bf16.msra.mxu0 0
    %268 = vmatprep.subr.bf16.mxu0 0
    %269 = vmatpush2.bf16.msra.mxu0 0
    %270 = vmatprep.mubr.bf16.mxu0 0
    %271 = vmatmul.mubr.bf16.gmra.mxu0 %v109
    %v272 = vpop.f32.mrf.mxu0
    %v273 = vadd.f32 0.0, %v272
    %v274 = vpop.f32.mrf.mxu0
    %v275 = vadd.f32 0.0, %v274
    %v276 = vpop.f32.mrf.mxu0
    %v277 = vpop.f32.mrf.mxu0
    %278 = vdwg.mxu0
    %279 = vmatprep.subr.bf16.mxu0 0
    %280 = vmatpush1.bf16.msra.mxu0 %v213
    %281 = vmatprep.subr.bf16.mxu0 0
    %282 = vmatpush1.bf16.msra.mxu0 %v210
    %283 = vmatprep.subr.bf16.mxu0 0
    %284 = vmatpush1.bf16.msra.mxu0 %v207
    %285 = vmatprep.subr.bf16.mxu0 0
    %286 = vmatpush1.bf16.msra.mxu0 %v204
    %287 = vmatprep.subr.bf16.mxu0 0
    %288 = vmatpush1.bf16.msra.mxu0 %v201
    %289 = vmatprep.subr.bf16.mxu0 0
    %290 = vmatpush1.bf16.msra.mxu0 %v198
    %291 = vmatprep.subr.bf16.mxu0 0
    %292 = vmatpush1.bf16.msra.mxu0 %v195
    %293 = vmatprep.subr.bf16.mxu0 0
    %294 = vmatpush1.bf16.msra.mxu0 %v192
    %295 = vmatprep.subr.bf16.mxu0 0
    %296 = vmatpush2.bf16.msra.mxu0 0
    %297 = vmatprep.subr.bf16.mxu0 0
    %298 = vmatpush2.bf16.msra.mxu0 0
    %299 = vmatprep.subr.bf16.mxu0 0
    %300 = vmatpush2.bf16.msra.mxu0 0
    %301 = vmatprep.subr.bf16.mxu0 0
    %302 = vmatpush2.bf16.msra.mxu0 0
    %303 = vmatprep.subr.bf16.mxu0 0
    %304 = vmatpush2.bf16.msra.mxu0 0
    %305 = vmatprep.subr.bf16.mxu0 0
    %306 = vmatpush2.bf16.msra.mxu0 0
    %307 = vmatprep.subr.bf16.mxu0 0
    %308 = vmatpush2.bf16.msra.mxu0 0
    %309 = vmatprep.subr.bf16.mxu0 0
    %310 = vmatpush2.bf16.msra.mxu0 0
    %311 = vmatprep.mubr.bf16.mxu0 0
    %312 = vmatmul.mubr.bf16.gmra.mxu0 %v109
    %v313 = vpop.f32.mrf.mxu0
    %v314 = vadd.f32 0.0, %v313
    %v315 = vpop.f32.mrf.mxu0
    %v316 = vpop.f32.mrf.mxu0
    %v317 = vpop.f32.mrf.mxu0
    %318 = vdwg.mxu0
    %v319 = vadd.f32 %v106, %v273
    %v320 = vxor.u32 %v319, 2147483648
    %v321 = vmul.f32 %v320, 1.442695
    %v322 = vpow.pop %v321
    %v323 = vadd.f32 %v322, 1.0
    %v324 = vrcp.pop %v323
    %v325 = vmul.f32 1.0, %v324
    %v326 = vadd.f32 %v107, %v275
    %v327 = vxor.u32 %v326, 2147483648
    %v328 = vmul.f32 %v327, 1.442695
    %v329 = vpow.pop %v328
    %v330 = vadd.f32 %v329, 1.0
    %v331 = vrcp.pop %v330
    %v332 = vmul.f32 1.0, %v331
    %v333 = vadd.f32 %v314, %v101
    %v334 = vmul.f32 %v325, %v333
    %v335 = vadd.f32 %v108, %v334
    %v336 = vtanh.pop %v335
    %v337 = vsub.f32 1.0, %v332
    %v338 = vmul.f32 %v337, %v336
    %v339 = vmul.f32 %v332, %v103
    %v340 = vadd.f32 %v338, %v339
    %v342 = vcombine.high %v340, %v340
    %v344 = vunpack.c.l.s4 1966171168
    %v345 = vunpack.c.0.s8 %v344
    %v346 = vlaneseq
    %v347 = vshrl.u32 %v346, 7
    %v348 = vsub.s32 %v345, %v347
    %v349 = vrot.slane %v340, %v348
    %v351 = vunpack.c.l.s4 1966171168
    %v352 = vunpack.c.0.s8 %v351
    %v353 = vlaneseq
    %v354 = vshrl.u32 %v353, 7
    %v355 = vsub.s32 %v352, %v354
    %v356 = vrot.slane %v342, %v355
    %v357 = vcombine.high %v349, %v349
    %v358 = vcombine.high %v356, %v356
    %v360 = vunpack.c.l.s4 1966171168
    %v361 = vunpack.c.0.s8 %v360
    %v362 = vlaneseq
    %v363 = vshrl.u32 %v362, 7
    %v364 = vsub.s32 %v361, %v363
    %v365 = vrot.slane %v349, %v364
    %v367 = vunpack.c.l.s4 1966171168
    %v368 = vunpack.c.0.s8 %v367
    %v369 = vlaneseq
    %v370 = vshrl.u32 %v369, 7
    %v371 = vsub.s32 %v368, %v370
    %v372 = vrot.slane %v356, %v371
    %v374 = vunpack.c.l.s4 1966171168
    %v375 = vunpack.c.0.s8 %v374
    %v376 = vlaneseq
    %v377 = vshrl.u32 %v376, 7
    %v378 = vsub.s32 %v375, %v377
    %v379 = vrot.slane %v357, %v378
    %v381 = vunpack.c.l.s4 1966171168
    %v382 = vunpack.c.0.s8 %v381
    %v383 = vlaneseq
    %v384 = vshrl.u32 %v383, 7
    %v385 = vsub.s32 %v382, %v384
    %v386 = vrot.slane %v358, %v385
    %v387 = vcombine.high %v365, %v365
    %v388 = vcombine.high %v372, %v372
    %v389 = vcombine.high %v379, %v379
    %v390 = vcombine.high %v386, %v386
    %399 = vst [vmem:[#allocation9] sm:$0x1] %v365
    %400 = vst [vmem:[#allocation9 + $0x8] sm:$0x1] %v379
    %401 = vst [vmem:[#allocation9 + $0x10] sm:$0x1] %v387
    %402 = vst [vmem:[#allocation9 + $0x18] sm:$0x1] %v389
    %403 = vst [vmem:[#allocation9 + $0x20] sm:$0x1] %v372
    %404 = vst [vmem:[#allocation9 + $0x28] sm:$0x1] %v386
    %405 = vst [vmem:[#allocation9 + $0x30] sm:$0x1] %v388
    %406 = vst [vmem:[#allocation9 + $0x38] sm:$0x1] %v390
    %s407 = scalar_lea.vmem [#allocation3], 12
    %v408 = vld [vmem:[%s407] sm:$0xff]
    %v409 = vld [vmem:[%s407 + $0x8] sm:$0xf]
    %v410 = vunpack.c.l.bf16 %v408
    %v411 = vunpack.c.h.bf16 %v408
    %v412 = vunpack.c.l.bf16 %v409
    %v413 = vpack.c.bf16 %v340, %v340
    %414 = vmatprep.subr.bf16.mxu0 %v212
    %415 = vmatpush1.bf16.msra.mxu0 %v211
    %416 = vmatprep.subr.bf16.mxu0 %v209
    %417 = vmatpush1.bf16.msra.mxu0 %v208
    %418 = vmatprep.subr.bf16.mxu0 %v206
    %419 = vmatpush1.bf16.msra.mxu0 %v205
    %420 = vmatprep.subr.bf16.mxu0 %v203
    %421 = vmatpush1.bf16.msra.mxu0 %v202
    %422 = vmatprep.subr.bf16.mxu0 %v200
    %423 = vmatpush1.bf16.msra.mxu0 %v199
    %424 = vmatprep.subr.bf16.mxu0 %v197
    %425 = vmatpush1.bf16.msra.mxu0 %v196
    %426 = vmatprep.subr.bf16.mxu0 %v194
    %427 = vmatpush1.bf16.msra.mxu0 %v193
    %428 = vmatprep.subr.bf16.mxu0 %v191
    %429 = vmatpush1.bf16.msra.mxu0 %v190
    %430 = vmatprep.subr.bf16.mxu0 0
    %431 = vmatpush2.bf16.msra.mxu0 0
    %432 = vmatprep.subr.bf16.mxu0 0
    %433 = vmatpush2.bf16.msra.mxu0 0
    %434 = vmatprep.subr.bf16.mxu0 0
    %435 = vmatpush2.bf16.msra.mxu0 0
    %436 = vmatprep.subr.bf16.mxu0 0
    %437 = vmatpush2.bf16.msra.mxu0 0
    %438 = vmatprep.subr.bf16.mxu0 0
    %439 = vmatpush2.bf16.msra.mxu0 0
    %440 = vmatprep.subr.bf16.mxu0 0
    %441 = vmatpush2.bf16.msra.mxu0 0
    %442 = vmatprep.subr.bf16.mxu0 0
    %443 = vmatpush2.bf16.msra.mxu0 0
    %444 = vmatprep.subr.bf16.mxu0 0
    %445 = vmatpush2.bf16.msra.mxu0 0
    %446 = vmatprep.mubr.bf16.mxu0 0
    %447 = vmatmul.mubr.bf16.gmra.mxu0 %v413
    %v448 = vpop.f32.mrf.mxu0
    %v449 = vadd.f32 0.0, %v448
    %v450 = vpop.f32.mrf.mxu0
    %v451 = vadd.f32 0.0, %v450
    %v452 = vpop.f32.mrf.mxu0
    %v453 = vpop.f32.mrf.mxu0
    %454 = vdwg.mxu0
    %455 = vmatprep.subr.bf16.mxu0 0
    %456 = vmatpush1.bf16.msra.mxu0 %v213
    %457 = vmatprep.subr.bf16.mxu0 0
    %458 = vmatpush1.bf16.msra.mxu0 %v210
    %459 = vmatprep.subr.bf16.mxu0 0
    %460 = vmatpush1.bf16.msra.mxu0 %v207
    %461 = vmatprep.subr.bf16.mxu0 0
    %462 = vmatpush1.bf16.msra.mxu0 %v204
    %463 = vmatprep.subr.bf16.mxu0 0
    %464 = vmatpush1.bf16.msra.mxu0 %v201
    %465 = vmatprep.subr.bf16.mxu0 0
    %466 = vmatpush1.bf16.msra.mxu0 %v198
    %467 = vmatprep.subr.bf16.mxu0 0
    %468 = vmatpush1.bf16.msra.mxu0 %v195
    %469 = vmatprep.subr.bf16.mxu0 0
    %470 = vmatpush1.bf16.msra.mxu0 %v192
    %471 = vmatprep.subr.bf16.mxu0 0
    %472 = vmatpush2.bf16.msra.mxu0 0
    %473 = vmatprep.subr.bf16.mxu0 0
    %474 = vmatpush2.bf16.msra.mxu0 0
    %475 = vmatprep.subr.bf16.mxu0 0
    %476 = vmatpush2.bf16.msra.mxu0 0
    %477 = vmatprep.subr.bf16.mxu0 0
    %478 = vmatpush2.bf16.msra.mxu0 0
    %479 = vmatprep.subr.bf16.mxu0 0
    %480 = vmatpush2.bf16.msra.mxu0 0
    %481 = vmatprep.subr.bf16.mxu0 0
    %482 = vmatpush2.bf16.msra.mxu0 0
    %483 = vmatprep.subr.bf16.mxu0 0
    %484 = vmatpush2.bf16.msra.mxu0 0
    %485 = vmatprep.subr.bf16.mxu0 0
    %486 = vmatpush2.bf16.msra.mxu0 0
    %487 = vmatprep.mubr.bf16.mxu0 0
    %488 = vmatmul.mubr.bf16.gmra.mxu0 %v413
    %v489 = vpop.f32.mrf.mxu0
    %v490 = vadd.f32 0.0, %v489
    %v491 = vpop.f32.mrf.mxu0
    %v492 = vpop.f32.mrf.mxu0
    %v493 = vpop.f32.mrf.mxu0
    %494 = vdwg.mxu0
    %v495 = vadd.f32 %v410, %v449
    %v496 = vxor.u32 %v495, 2147483648
    %v497 = vmul.f32 %v496, 1.442695
    %v498 = vpow.pop %v497
    %v499 = vadd.f32 %v498, 1.0
    %v500 = vrcp.pop %v499
    %v501 = vmul.f32 1.0, %v500
    %v502 = vadd.f32 %v411, %v451
    %v503 = vxor.u32 %v502, 2147483648
    %v504 = vmul.f32 %v503, 1.442695
    %v505 = vpow.pop %v504
    %v506 = vadd.f32 %v505, 1.0
    %v507 = vrcp.pop %v506
    %v508 = vmul.f32 1.0, %v507
    %v509 = vadd.f32 %v490, %v101
    %v510 = vmul.f32 %v501, %v509
    %v511 = vadd.f32 %v412, %v510
    %v512 = vtanh.pop %v511
    %v513 = vsub.f32 1.0, %v508
    %v514 = vmul.f32 %v513, %v512
    %v515 = vmul.f32 %v508, %v340
    %v516 = vadd.f32 %v514, %v515
    %v518 = vcombine.high %v516, %v516
    %v520 = vunpack.c.l.s4 1966171168
    %v521 = vunpack.c.0.s8 %v520
    %v522 = vlaneseq
    %v523 = vshrl.u32 %v522, 7
    %v524 = vsub.s32 %v521, %v523
    %v525 = vrot.slane %v516, %v524
    %v527 = vunpack.c.l.s4 1966171168
    %v528 = vunpack.c.0.s8 %v527
    %v529 = vlaneseq
    %v530 = vshrl.u32 %v529, 7
    %v531 = vsub.s32 %v528, %v530
    %v532 = vrot.slane %v518, %v531
    %v533 = vcombine.high %v525, %v525
    %v534 = vcombine.high %v532, %v532
    %v536 = vunpack.c.l.s4 1966171168
    %v537 = vunpack.c.0.s8 %v536
    %v538 = vlaneseq
    %v539 = vshrl.u32 %v538, 7
    %v540 = vsub.s32 %v537, %v539
    %v541 = vrot.slane %v525, %v540
    %v543 = vunpack.c.l.s4 1966171168
    %v544 = vunpack.c.0.s8 %v543
    %v545 = vlaneseq
    %v546 = vshrl.u32 %v545, 7
    %v547 = vsub.s32 %v544, %v546
    %v548 = vrot.slane %v532, %v547
    %v550 = vunpack.c.l.s4 1966171168
    %v551 = vunpack.c.0.s8 %v550
    %v552 = vlaneseq
    %v553 = vshrl.u32 %v552, 7
    %v554 = vsub.s32 %v551, %v553
    %v555 = vrot.slane %v533, %v554
    %v557 = vunpack.c.l.s4 1966171168
    %v558 = vunpack.c.0.s8 %v557
    %v559 = vlaneseq
    %v560 = vshrl.u32 %v559, 7
    %v561 = vsub.s32 %v558, %v560
    %v562 = vrot.slane %v534, %v561
    %v563 = vcombine.high %v541, %v541
    %v564 = vcombine.high %v548, %v548
    %v565 = vcombine.high %v555, %v555
    %v566 = vcombine.high %v562, %v562
    %575 = vst [vmem:[#allocation9 + $0x1] sm:$0x1] %v541
    %576 = vst [vmem:[#allocation9 + $0x9] sm:$0x1] %v555
    %577 = vst [vmem:[#allocation9 + $0x11] sm:$0x1] %v563
    %578 = vst [vmem:[#allocation9 + $0x19] sm:$0x1] %v565
    %579 = vst [vmem:[#allocation9 + $0x21] sm:$0x1] %v548
    %580 = vst [vmem:[#allocation9 + $0x29] sm:$0x1] %v562
    %581 = vst [vmem:[#allocation9 + $0x31] sm:$0x1] %v564
    %582 = vst [vmem:[#allocation9 + $0x39] sm:$0x1] %v566
    %s583 = scalar_lea.vmem [#allocation3], 24
    %v584 = vld [vmem:[%s583] sm:$0xff]
    %v585 = vld [vmem:[%s583 + $0x8] sm:$0xf]
    %v586 = vunpack.c.l.bf16 %v584
    %v587 = vunpack.c.h.bf16 %v584
    %v588 = vunpack.c.l.bf16 %v585
    %v589 = vpack.c.bf16 %v516, %v516
    %590 = vmatprep.subr.bf16.mxu0 %v212
    %591 = vmatpush1.bf16.msra.mxu0 %v211
    %592 = vmatprep.subr.bf16.mxu0 %v209
    %593 = vmatpush1.bf16.msra.mxu0 %v208
    %594 = vmatprep.subr.bf16.mxu0 %v206
    %595 = vmatpush1.bf16.msra.mxu0 %v205
    %596 = vmatprep.subr.bf16.mxu0 %v203
    %597 = vmatpush1.bf16.msra.mxu0 %v202
    %598 = vmatprep.subr.bf16.mxu0 %v200
    %599 = vmatpush1.bf16.msra.mxu0 %v199
    %600 = vmatprep.subr.bf16.mxu0 %v197
    %601 = vmatpush1.bf16.msra.mxu0 %v196
    %602 = vmatprep.subr.bf16.mxu0 %v194
    %603 = vmatpush1.bf16.msra.mxu0 %v193
    %604 = vmatprep.subr.bf16.mxu0 %v191
    %605 = vmatpush1.bf16.msra.mxu0 %v190
    %606 = vmatprep.subr.bf16.mxu0 0
    %607 = vmatpush2.bf16.msra.mxu0 0
    %608 = vmatprep.subr.bf16.mxu0 0
    %609 = vmatpush2.bf16.msra.mxu0 0
    %610 = vmatprep.subr.bf16.mxu0 0
    %611 = vmatpush2.bf16.msra.mxu0 0
    %612 = vmatprep.subr.bf16.mxu0 0
    %613 = vmatpush2.bf16.msra.mxu0 0
    %614 = vmatprep.subr.bf16.mxu0 0
    %615 = vmatpush2.bf16.msra.mxu0 0
    %616 = vmatprep.subr.bf16.mxu0 0
    %617 = vmatpush2.bf16.msra.mxu0 0
    %618 = vmatprep.subr.bf16.mxu0 0
    %619 = vmatpush2.bf16.msra.mxu0 0
    %620 = vmatprep.subr.bf16.mxu0 0
    %621 = vmatpush2.bf16.msra.mxu0 0
    %622 = vmatprep.mubr.bf16.mxu0 0
    %623 = vmatmul.mubr.bf16.gmra.mxu0 %v589
    %v624 = vpop.f32.mrf.mxu0
    %v625 = vadd.f32 0.0, %v624
    %v626 = vpop.f32.mrf.mxu0
    %v627 = vadd.f32 0.0, %v626
    %v628 = vpop.f32.mrf.mxu0
    %v629 = vpop.f32.mrf.mxu0
    %630 = vdwg.mxu0
    %631 = vmatprep.subr.bf16.mxu0 0
    %632 = vmatpush1.bf16.msra.mxu0 %v213
    %633 = vmatprep.subr.bf16.mxu0 0
    %634 = vmatpush1.bf16.msra.mxu0 %v210
    %635 = vmatprep.subr.bf16.mxu0 0
    %636 = vmatpush1.bf16.msra.mxu0 %v207
    %637 = vmatprep.subr.bf16.mxu0 0
    %638 = vmatpush1.bf16.msra.mxu0 %v204
    %639 = vmatprep.subr.bf16.mxu0 0
    %640 = vmatpush1.bf16.msra.mxu0 %v201
    %641 = vmatprep.subr.bf16.mxu0 0
    %642 = vmatpush1.bf16.msra.mxu0 %v198
    %643 = vmatprep.subr.bf16.mxu0 0
    %644 = vmatpush1.bf16.msra.mxu0 %v195
    %645 = vmatprep.subr.bf16.mxu0 0
    %646 = vmatpush1.bf16.msra.mxu0 %v192
    %647 = vmatprep.subr.bf16.mxu0 0
    %648 = vmatpush2.bf16.msra.mxu0 0
    %649 = vmatprep.subr.bf16.mxu0 0
    %650 = vmatpush2.bf16.msra.mxu0 0
    %651 = vmatprep.subr.bf16.mxu0 0
    %652 = vmatpush2.bf16.msra.mxu0 0
    %653 = vmatprep.subr.bf16.mxu0 0
    %654 = vmatpush2.bf16.msra.mxu0 0
    %655 = vmatprep.subr.bf16.mxu0 0
    %656 = vmatpush2.bf16.msra.mxu0 0
    %657 = vmatprep.subr.bf16.mxu0 0
    %658 = vmatpush2.bf16.msra.mxu0 0
    %659 = vmatprep.subr.bf16.mxu0 0
    %660 = vmatpush2.bf16.msra.mxu0 0
    %661 = vmatprep.subr.bf16.mxu0 0
    %662 = vmatpush2.bf16.msra.mxu0 0
    %663 = vmatprep.mubr.bf16.mxu0 0
    %664 = vmatmul.mubr.bf16.gmra.mxu0 %v589
    %v665 = vpop.f32.mrf.mxu0
    %v666 = vadd.f32 0.0, %v665
    %v667 = vpop.f32.mrf.mxu0
    %v668 = vpop.f32.mrf.mxu0
    %v669 = vpop.f32.mrf.mxu0
    %670 = vdwg.mxu0
    %v671 = vadd.f32 %v586, %v625
    %v672 = vxor.u32 %v671, 2147483648
    %v673 = vmul.f32 %v672, 1.442695
    %v674 = vpow.pop %v673
    %v675 = vadd.f32 %v674, 1.0
    %v676 = vrcp.pop %v675
    %v677 = vmul.f32 1.0, %v676
    %v678 = vadd.f32 %v587, %v627
    %v679 = vxor.u32 %v678, 2147483648
    %v680 = vmul.f32 %v679, 1.442695
    %v681 = vpow.pop %v680
    %v682 = vadd.f32 %v681, 1.0
    %v683 = vrcp.pop %v682
    %v684 = vmul.f32 1.0, %v683
    %v685 = vadd.f32 %v666, %v101
    %v686 = vmul.f32 %v677, %v685
    %v687 = vadd.f32 %v588, %v686
    %v688 = vtanh.pop %v687
    %v689 = vsub.f32 1.0, %v684
    %v690 = vmul.f32 %v689, %v688
    %v691 = vmul.f32 %v684, %v516
    %v692 = vadd.f32 %v690, %v691
    %v694 = vcombine.high %v692, %v692
    %v696 = vunpack.c.l.s4 1966171168
    %v697 = vunpack.c.0.s8 %v696
    %v698 = vlaneseq
    %v699 = vshrl.u32 %v698, 7
    %v700 = vsub.s32 %v697, %v699
    %v701 = vrot.slane %v692, %v700
    %v703 = vunpack.c.l.s4 1966171168
    %v704 = vunpack.c.0.s8 %v703
    %v705 = vlaneseq
    %v706 = vshrl.u32 %v705, 7
    %v707 = vsub.s32 %v704, %v706
    %v708 = vrot.slane %v694, %v707
    %v709 = vcombine.high %v701, %v701
    %v710 = vcombine.high %v708, %v708
    %v712 = vunpack.c.l.s4 1966171168
    %v713 = vunpack.c.0.s8 %v712
    %v714 = vlaneseq
    %v715 = vshrl.u32 %v714, 7
    %v716 = vsub.s32 %v713, %v715
    %v717 = vrot.slane %v701, %v716
    %v719 = vunpack.c.l.s4 1966171168
    %v720 = vunpack.c.0.s8 %v719
    %v721 = vlaneseq
    %v722 = vshrl.u32 %v721, 7
    %v723 = vsub.s32 %v720, %v722
    %v724 = vrot.slane %v708, %v723
    %v726 = vunpack.c.l.s4 1966171168
    %v727 = vunpack.c.0.s8 %v726
    %v728 = vlaneseq
    %v729 = vshrl.u32 %v728, 7
    %v730 = vsub.s32 %v727, %v729
    %v731 = vrot.slane %v709, %v730
    %v733 = vunpack.c.l.s4 1966171168
    %v734 = vunpack.c.0.s8 %v733
    %v735 = vlaneseq
    %v736 = vshrl.u32 %v735, 7
    %v737 = vsub.s32 %v734, %v736
    %v738 = vrot.slane %v710, %v737
    %v739 = vcombine.high %v717, %v717
    %v740 = vcombine.high %v724, %v724
    %v741 = vcombine.high %v731, %v731
    %v742 = vcombine.high %v738, %v738
    %751 = vst [vmem:[#allocation9 + $0x2] sm:$0x1] %v717
    %752 = vst [vmem:[#allocation9 + $0xa] sm:$0x1] %v731
    %753 = vst [vmem:[#allocation9 + $0x12] sm:$0x1] %v739
    %754 = vst [vmem:[#allocation9 + $0x1a] sm:$0x1] %v741
    %755 = vst [vmem:[#allocation9 + $0x22] sm:$0x1] %v724
    %756 = vst [vmem:[#allocation9 + $0x2a] sm:$0x1] %v738
    %757 = vst [vmem:[#allocation9 + $0x32] sm:$0x1] %v740
    %758 = vst [vmem:[#allocation9 + $0x3a] sm:$0x1] %v742
    %s759 = scalar_lea.vmem [#allocation3], 36
    %v760 = vld [vmem:[%s759] sm:$0xff]
    %v761 = vld [vmem:[%s759 + $0x8] sm:$0xf]
    %v762 = vunpack.c.l.bf16 %v760
    %v763 = vunpack.c.h.bf16 %v760
    %v764 = vunpack.c.l.bf16 %v761
    %v765 = vpack.c.bf16 %v692, %v692
    %766 = vmatprep.subr.bf16.mxu0 %v212
    %767 = vmatpush1.bf16.msra.mxu0 %v211
    %768 = vmatprep.subr.bf16.mxu0 %v209
    %769 = vmatpush1.bf16.msra.mxu0 %v208
    %770 = vmatprep.subr.bf16.mxu0 %v206
    %771 = vmatpush1.bf16.msra.mxu0 %v205
    %772 = vmatprep.subr.bf16.mxu0 %v203
    %773 = vmatpush1.bf16.msra.mxu0 %v202
    %774 = vmatprep.subr.bf16.mxu0 %v200
    %775 = vmatpush1.bf16.msra.mxu0 %v199
    %776 = vmatprep.subr.bf16.mxu0 %v197
    %777 = vmatpush1.bf16.msra.mxu0 %v196
    %778 = vmatprep.subr.bf16.mxu0 %v194
    %779 = vmatpush1.bf16.msra.mxu0 %v193
    %780 = vmatprep.subr.bf16.mxu0 %v191
    %781 = vmatpush1.bf16.msra.mxu0 %v190
    %782 = vmatprep.subr.bf16.mxu0 0
    %783 = vmatpush2.bf16.msra.mxu0 0
    %784 = vmatprep.subr.bf16.mxu0 0
    %785 = vmatpush2.bf16.msra.mxu0 0
    %786 = vmatprep.subr.bf16.mxu0 0
    %787 = vmatpush2.bf16.msra.mxu0 0
    %788 = vmatprep.subr.bf16.mxu0 0
    %789 = vmatpush2.bf16.msra.mxu0 0
    %790 = vmatprep.subr.bf16.mxu0 0
    %791 = vmatpush2.bf16.msra.mxu0 0
    %792 = vmatprep.subr.bf16.mxu0 0
    %793 = vmatpush2.bf16.msra.mxu0 0
    %794 = vmatprep.subr.bf16.mxu0 0
    %795 = vmatpush2.bf16.msra.mxu0 0
    %796 = vmatprep.subr.bf16.mxu0 0
    %797 = vmatpush2.bf16.msra.mxu0 0
    %798 = vmatprep.mubr.bf16.mxu0 0
    %799 = vmatmul.mubr.bf16.gmra.mxu0 %v765
    %v800 = vpop.f32.mrf.mxu0
    %v801 = vadd.f32 0.0, %v800
    %v802 = vpop.f32.mrf.mxu0
    %v803 = vadd.f32 0.0, %v802
    %v804 = vpop.f32.mrf.mxu0
    %v805 = vpop.f32.mrf.mxu0
    %806 = vdwg.mxu0
    %807 = vmatprep.subr.bf16.mxu0 0
    %808 = vmatpush1.bf16.msra.mxu0 %v213
    %809 = vmatprep.subr.bf16.mxu0 0
    %810 = vmatpush1.bf16.msra.mxu0 %v210
    %811 = vmatprep.subr.bf16.mxu0 0
    %812 = vmatpush1.bf16.msra.mxu0 %v207
    %813 = vmatprep.subr.bf16.mxu0 0
    %814 = vmatpush1.bf16.msra.mxu0 %v204
    %815 = vmatprep.subr.bf16.mxu0 0
    %816 = vmatpush1.bf16.msra.mxu0 %v201
    %817 = vmatprep.subr.bf16.mxu0 0
    %818 = vmatpush1.bf16.msra.mxu0 %v198
    %819 = vmatprep.subr.bf16.mxu0 0
    %820 = vmatpush1.bf16.msra.mxu0 %v195
    %821 = vmatprep.subr.bf16.mxu0 0
    %822 = vmatpush1.bf16.msra.mxu0 %v192
    %823 = vmatprep.subr.bf16.mxu0 0
    %824 = vmatpush2.bf16.msra.mxu0 0
    %825 = vmatprep.subr.bf16.mxu0 0
    %826 = vmatpush2.bf16.msra.mxu0 0
    %827 = vmatprep.subr.bf16.mxu0 0
    %828 = vmatpush2.bf16.msra.mxu0 0
    %829 = vmatprep.subr.bf16.mxu0 0
    %830 = vmatpush2.bf16.msra.mxu0 0
    %831 = vmatprep.subr.bf16.mxu0 0
    %832 = vmatpush2.bf16.msra.mxu0 0
    %833 = vmatprep.subr.bf16.mxu0 0
    %834 = vmatpush2.bf16.msra.mxu0 0
    %835 = vmatprep.subr.bf16.mxu0 0
    %836 = vmatpush2.bf16.msra.mxu0 0
    %837 = vmatprep.subr.bf16.mxu0 0
    %838 = vmatpush2.bf16.msra.mxu0 0
    %839 = vmatprep.mubr.bf16.mxu0 0
    %840 = vmatmul.mubr.bf16.gmra.mxu0 %v765
    %v841 = vpop.f32.mrf.mxu0
    %v842 = vadd.f32 0.0, %v841
    %v843 = vpop.f32.mrf.mxu0
    %v844 = vpop.f32.mrf.mxu0
    %v845 = vpop.f32.mrf.mxu0
    %846 = vdwg.mxu0
    %v847 = vadd.f32 %v762, %v801
    %v848 = vxor.u32 %v847, 2147483648
    %v849 = vmul.f32 %v848, 1.442695
    %v850 = vpow.pop %v849
    %v851 = vadd.f32 %v850, 1.0
    %v852 = vrcp.pop %v851
    %v853 = vmul.f32 1.0, %v852
    %v854 = vadd.f32 %v763, %v803
    %v855 = vxor.u32 %v854, 2147483648
    %v856 = vmul.f32 %v855, 1.442695
    %v857 = vpow.pop %v856
    %v858 = vadd.f32 %v857, 1.0
    %v859 = vrcp.pop %v858
    %v860 = vmul.f32 1.0, %v859
    %v861 = vadd.f32 %v842, %v101
    %v862 = vmul.f32 %v853, %v861
    %v863 = vadd.f32 %v764, %v862
    %v864 = vtanh.pop %v863
    %v865 = vsub.f32 1.0, %v860
    %v866 = vmul.f32 %v865, %v864
    %v867 = vmul.f32 %v860, %v692
    %v868 = vadd.f32 %v866, %v867
    %v870 = vcombine.high %v868, %v868
    %v872 = vunpack.c.l.s4 1966171168
    %v873 = vunpack.c.0.s8 %v872
    %v874 = vlaneseq
    %v875 = vshrl.u32 %v874, 7
    %v876 = vsub.s32 %v873, %v875
    %v877 = vrot.slane %v868, %v876
    %v879 = vunpack.c.l.s4 1966171168
    %v880 = vunpack.c.0.s8 %v879
    %v881 = vlaneseq
    %v882 = vshrl.u32 %v881, 7
    %v883 = vsub.s32 %v880, %v882
    %v884 = vrot.slane %v870, %v883
    %v885 = vcombine.high %v877, %v877
    %v886 = vcombine.high %v884, %v884
    %v888 = vunpack.c.l.s4 1966171168
    %v889 = vunpack.c.0.s8 %v888
    %v890 = vlaneseq
    %v891 = vshrl.u32 %v890, 7
    %v892 = vsub.s32 %v889, %v891
    %v893 = vrot.slane %v877, %v892
    %v895 = vunpack.c.l.s4 1966171168
    %v896 = vunpack.c.0.s8 %v895
    %v897 = vlaneseq
    %v898 = vshrl.u32 %v897, 7
    %v899 = vsub.s32 %v896, %v898
    %v900 = vrot.slane %v884, %v899
    %v902 = vunpack.c.l.s4 1966171168
    %v903 = vunpack.c.0.s8 %v902
    %v904 = vlaneseq
    %v905 = vshrl.u32 %v904, 7
    %v906 = vsub.s32 %v903, %v905
    %v907 = vrot.slane %v885, %v906
    %v909 = vunpack.c.l.s4 1966171168
    %v910 = vunpack.c.0.s8 %v909
    %v911 = vlaneseq
    %v912 = vshrl.u32 %v911, 7
    %v913 = vsub.s32 %v910, %v912
    %v914 = vrot.slane %v886, %v913
    %v915 = vcombine.high %v893, %v893
    %v916 = vcombine.high %v900, %v900
    %v917 = vcombine.high %v907, %v907
    %v918 = vcombine.high %v914, %v914
    %927 = vst [vmem:[#allocation9 + $0x3] sm:$0x1] %v893
    %928 = vst [vmem:[#allocation9 + $0xb] sm:$0x1] %v907
    %929 = vst [vmem:[#allocation9 + $0x13] sm:$0x1] %v915
    %930 = vst [vmem:[#allocation9 + $0x1b] sm:$0x1] %v917
    %931 = vst [vmem:[#allocation9 + $0x23] sm:$0x1] %v900
    %932 = vst [vmem:[#allocation9 + $0x2b] sm:$0x1] %v914
    %933 = vst [vmem:[#allocation9 + $0x33] sm:$0x1] %v916
    %934 = vst [vmem:[#allocation9 + $0x3b] sm:$0x1] %v918
    %s935 = scalar_lea.vmem [#allocation3], 48
    %v936 = vld [vmem:[%s935] sm:$0xff]
    %v937 = vld [vmem:[%s935 + $0x8] sm:$0xf]
    %v938 = vunpack.c.l.bf16 %v936
    %v939 = vunpack.c.h.bf16 %v936
    %v940 = vunpack.c.l.bf16 %v937
    %v941 = vpack.c.bf16 %v868, %v868
    %942 = vmatprep.subr.bf16.mxu0 %v212
    %943 = vmatpush1.bf16.msra.mxu0 %v211
    %944 = vmatprep.subr.bf16.mxu0 %v209
    %945 = vmatpush1.bf16.msra.mxu0 %v208
    %946 = vmatprep.subr.bf16.mxu0 %v206
    %947 = vmatpush1.bf16.msra.mxu0 %v205
    %948 = vmatprep.subr.bf16.mxu0 %v203
    %949 = vmatpush1.bf16.msra.mxu0 %v202
    %950 = vmatprep.subr.bf16.mxu0 %v200
    %951 = vmatpush1.bf16.msra.mxu0 %v199
    %952 = vmatprep.subr.bf16.mxu0 %v197
    %953 = vmatpush1.bf16.msra.mxu0 %v196
    %954 = vmatprep.subr.bf16.mxu0 %v194
    %955 = vmatpush1.bf16.msra.mxu0 %v193
    %956 = vmatprep.subr.bf16.mxu0 %v191
    %957 = vmatpush1.bf16.msra.mxu0 %v190
    %958 = vmatprep.subr.bf16.mxu0 0
    %959 = vmatpush2.bf16.msra.mxu0 0
    %960 = vmatprep.subr.bf16.mxu0 0
    %961 = vmatpush2.bf16.msra.mxu0 0
    %962 = vmatprep.subr.bf16.mxu0 0
    %963 = vmatpush2.bf16.msra.mxu0 0
    %964 = vmatprep.subr.bf16.mxu0 0
    %965 = vmatpush2.bf16.msra.mxu0 0
    %966 = vmatprep.subr.bf16.mxu0 0
    %967 = vmatpush2.bf16.msra.mxu0 0
    %968 = vmatprep.subr.bf16.mxu0 0
    %969 = vmatpush2.bf16.msra.mxu0 0
    %970 = vmatprep.subr.bf16.mxu0 0
    %971 = vmatpush2.bf16.msra.mxu0 0
    %972 = vmatprep.subr.bf16.mxu0 0
    %973 = vmatpush2.bf16.msra.mxu0 0
    %974 = vmatprep.mubr.bf16.mxu0 0
    %975 = vmatmul.mubr.bf16.gmra.mxu0 %v941
    %v976 = vpop.f32.mrf.mxu0
    %v977 = vadd.f32 0.0, %v976
    %v978 = vpop.f32.mrf.mxu0
    %v979 = vadd.f32 0.0, %v978
    %v980 = vpop.f32.mrf.mxu0
    %v981 = vpop.f32.mrf.mxu0
    %982 = vdwg.mxu0
    %983 = vmatprep.subr.bf16.mxu0 0
    %984 = vmatpush1.bf16.msra.mxu0 %v213
    %985 = vmatprep.subr.bf16.mxu0 0
    %986 = vmatpush1.bf16.msra.mxu0 %v210
    %987 = vmatprep.subr.bf16.mxu0 0
    %988 = vmatpush1.bf16.msra.mxu0 %v207
    %989 = vmatprep.subr.bf16.mxu0 0
    %990 = vmatpush1.bf16.msra.mxu0 %v204
    %991 = vmatprep.subr.bf16.mxu0 0
    %992 = vmatpush1.bf16.msra.mxu0 %v201
    %993 = vmatprep.subr.bf16.mxu0 0
    %994 = vmatpush1.bf16.msra.mxu0 %v198
    %995 = vmatprep.subr.bf16.mxu0 0
    %996 = vmatpush1.bf16.msra.mxu0 %v195
    %997 = vmatprep.subr.bf16.mxu0 0
    %998 = vmatpush1.bf16.msra.mxu0 %v192
    %999 = vmatprep.subr.bf16.mxu0 0
    %1000 = vmatpush2.bf16.msra.mxu0 0
    %1001 = vmatprep.subr.bf16.mxu0 0
    %1002 = vmatpush2.bf16.msra.mxu0 0
    %1003 = vmatprep.subr.bf16.mxu0 0
    %1004 = vmatpush2.bf16.msra.mxu0 0
    %1005 = vmatprep.subr.bf16.mxu0 0
    %1006 = vmatpush2.bf16.msra.mxu0 0
    %1007 = vmatprep.subr.bf16.mxu0 0
    %1008 = vmatpush2.bf16.msra.mxu0 0
    %1009 = vmatprep.subr.bf16.mxu0 0
    %1010 = vmatpush2.bf16.msra.mxu0 0
    %1011 = vmatprep.subr.bf16.mxu0 0
    %1012 = vmatpush2.bf16.msra.mxu0 0
    %1013 = vmatprep.subr.bf16.mxu0 0
    %1014 = vmatpush2.bf16.msra.mxu0 0
    %1015 = vmatprep.mubr.bf16.mxu0 0
    %1016 = vmatmul.mubr.bf16.gmra.mxu0 %v941
    %v1017 = vpop.f32.mrf.mxu0
    %v1018 = vadd.f32 0.0, %v1017
    %v1019 = vpop.f32.mrf.mxu0
    %v1020 = vpop.f32.mrf.mxu0
    %v1021 = vpop.f32.mrf.mxu0
    %1022 = vdwg.mxu0
    %v1023 = vadd.f32 %v938, %v977
    %v1024 = vxor.u32 %v1023, 2147483648
    %v1025 = vmul.f32 %v1024, 1.442695
    %v1026 = vpow.pop %v1025
    %v1027 = vadd.f32 %v1026, 1.0
    %v1028 = vrcp.pop %v1027
    %v1029 = vmul.f32 1.0, %v1028
    %v1030 = vadd.f32 %v939, %v979
    %v1031 = vxor.u32 %v1030, 2147483648
    %v1032 = vmul.f32 %v1031, 1.442695
    %v1033 = vpow.pop %v1032
    %v1034 = vadd.f32 %v1033, 1.0
    %v1035 = vrcp.pop %v1034
    %v1036 = vmul.f32 1.0, %v1035
    %v1037 = vadd.f32 %v1018, %v101
    %v1038 = vmul.f32 %v1029, %v1037
    %v1039 = vadd.f32 %v940, %v1038
    %v1040 = vtanh.pop %v1039
    %v1041 = vsub.f32 1.0, %v1036
    %v1042 = vmul.f32 %v1041, %v1040
    %v1043 = vmul.f32 %v1036, %v868
    %v1044 = vadd.f32 %v1042, %v1043
    %v1046 = vcombine.high %v1044, %v1044
    %v1048 = vunpack.c.l.s4 1966171168
    %v1049 = vunpack.c.0.s8 %v1048
    %v1050 = vlaneseq
    %v1051 = vshrl.u32 %v1050, 7
    %v1052 = vsub.s32 %v1049, %v1051
    %v1053 = vrot.slane %v1044, %v1052
    %v1055 = vunpack.c.l.s4 1966171168
    %v1056 = vunpack.c.0.s8 %v1055
    %v1057 = vlaneseq
    %v1058 = vshrl.u32 %v1057, 7
    %v1059 = vsub.s32 %v1056, %v1058
    %v1060 = vrot.slane %v1046, %v1059
    %v1061 = vcombine.high %v1053, %v1053
    %v1062 = vcombine.high %v1060, %v1060
    %v1064 = vunpack.c.l.s4 1966171168
    %v1065 = vunpack.c.0.s8 %v1064
    %v1066 = vlaneseq
    %v1067 = vshrl.u32 %v1066, 7
    %v1068 = vsub.s32 %v1065, %v1067
    %v1069 = vrot.slane %v1053, %v1068
    %v1071 = vunpack.c.l.s4 1966171168
    %v1072 = vunpack.c.0.s8 %v1071
    %v1073 = vlaneseq
    %v1074 = vshrl.u32 %v1073, 7
    %v1075 = vsub.s32 %v1072, %v1074
    %v1076 = vrot.slane %v1060, %v1075
    %v1078 = vunpack.c.l.s4 1966171168
    %v1079 = vunpack.c.0.s8 %v1078
    %v1080 = vlaneseq
    %v1081 = vshrl.u32 %v1080, 7
    %v1082 = vsub.s32 %v1079, %v1081
    %v1083 = vrot.slane %v1061, %v1082
    %v1085 = vunpack.c.l.s4 1966171168
    %v1086 = vunpack.c.0.s8 %v1085
    %v1087 = vlaneseq
    %v1088 = vshrl.u32 %v1087, 7
    %v1089 = vsub.s32 %v1086, %v1088
    %v1090 = vrot.slane %v1062, %v1089
    %v1091 = vcombine.high %v1069, %v1069
    %v1092 = vcombine.high %v1076, %v1076
    %v1093 = vcombine.high %v1083, %v1083
    %v1094 = vcombine.high %v1090, %v1090
    %1103 = vst [vmem:[#allocation9 + $0x4] sm:$0x1] %v1069
    %1104 = vst [vmem:[#allocation9 + $0xc] sm:$0x1] %v1083
    %1105 = vst [vmem:[#allocation9 + $0x14] sm:$0x1] %v1091
    %1106 = vst [vmem:[#allocation9 + $0x1c] sm:$0x1] %v1093
    %1107 = vst [vmem:[#allocation9 + $0x24] sm:$0x1] %v1076
    %1108 = vst [vmem:[#allocation9 + $0x2c] sm:$0x1] %v1090
    %1109 = vst [vmem:[#allocation9 + $0x34] sm:$0x1] %v1092
    %1110 = vst [vmem:[#allocation9 + $0x3c] sm:$0x1] %v1094
    %s1111 = scalar_lea.vmem [#allocation3], 60
    %v1112 = vld [vmem:[%s1111] sm:$0xff]
    %v1113 = vld [vmem:[%s1111 + $0x8] sm:$0xf]
    %v1114 = vunpack.c.l.bf16 %v1112
    %v1115 = vunpack.c.h.bf16 %v1112
    %v1116 = vunpack.c.l.bf16 %v1113
    %v1117 = vpack.c.bf16 %v1044, %v1044
    %1118 = vmatprep.subr.bf16.mxu0 %v212
    %1119 = vmatpush1.bf16.msra.mxu0 %v211
    %1120 = vmatprep.subr.bf16.mxu0 %v209
    %1121 = vmatpush1.bf16.msra.mxu0 %v208
    %1122 = vmatprep.subr.bf16.mxu0 %v206
    %1123 = vmatpush1.bf16.msra.mxu0 %v205
    %1124 = vmatprep.subr.bf16.mxu0 %v203
    %1125 = vmatpush1.bf16.msra.mxu0 %v202
    %1126 = vmatprep.subr.bf16.mxu0 %v200
    %1127 = vmatpush1.bf16.msra.mxu0 %v199
    %1128 = vmatprep.subr.bf16.mxu0 %v197
    %1129 = vmatpush1.bf16.msra.mxu0 %v196
    %1130 = vmatprep.subr.bf16.mxu0 %v194
    %1131 = vmatpush1.bf16.msra.mxu0 %v193
    %1132 = vmatprep.subr.bf16.mxu0 %v191
    %1133 = vmatpush1.bf16.msra.mxu0 %v190
    %1134 = vmatprep.subr.bf16.mxu0 0
    %1135 = vmatpush2.bf16.msra.mxu0 0
    %1136 = vmatprep.subr.bf16.mxu0 0
    %1137 = vmatpush2.bf16.msra.mxu0 0
    %1138 = vmatprep.subr.bf16.mxu0 0
    %1139 = vmatpush2.bf16.msra.mxu0 0
    %1140 = vmatprep.subr.bf16.mxu0 0
    %1141 = vmatpush2.bf16.msra.mxu0 0
    %1142 = vmatprep.subr.bf16.mxu0 0
    %1143 = vmatpush2.bf16.msra.mxu0 0
    %1144 = vmatprep.subr.bf16.mxu0 0
    %1145 = vmatpush2.bf16.msra.mxu0 0
    %1146 = vmatprep.subr.bf16.mxu0 0
    %1147 = vmatpush2.bf16.msra.mxu0 0
    %1148 = vmatprep.subr.bf16.mxu0 0
    %1149 = vmatpush2.bf16.msra.mxu0 0
    %1150 = vmatprep.mubr.bf16.mxu0 0
    %1151 = vmatmul.mubr.bf16.gmra.mxu0 %v1117
    %v1152 = vpop.f32.mrf.mxu0
    %v1153 = vadd.f32 0.0, %v1152
    %v1154 = vpop.f32.mrf.mxu0
    %v1155 = vadd.f32 0.0, %v1154
    %v1156 = vpop.f32.mrf.mxu0
    %v1157 = vpop.f32.mrf.mxu0
    %1158 = vdwg.mxu0
    %1159 = vmatprep.subr.bf16.mxu0 0
    %1160 = vmatpush1.bf16.msra.mxu0 %v213
    %1161 = vmatprep.subr.bf16.mxu0 0
    %1162 = vmatpush1.bf16.msra.mxu0 %v210
    %1163 = vmatprep.subr.bf16.mxu0 0
    %1164 = vmatpush1.bf16.msra.mxu0 %v207
    %1165 = vmatprep.subr.bf16.mxu0 0
    %1166 = vmatpush1.bf16.msra.mxu0 %v204
    %1167 = vmatprep.subr.bf16.mxu0 0
    %1168 = vmatpush1.bf16.msra.mxu0 %v201
    %1169 = vmatprep.subr.bf16.mxu0 0
    %1170 = vmatpush1.bf16.msra.mxu0 %v198
    %1171 = vmatprep.subr.bf16.mxu0 0
    %1172 = vmatpush1.bf16.msra.mxu0 %v195
    %1173 = vmatprep.subr.bf16.mxu0 0
    %1174 = vmatpush1.bf16.msra.mxu0 %v192
    %1175 = vmatprep.subr.bf16.mxu0 0
    %1176 = vmatpush2.bf16.msra.mxu0 0
    %1177 = vmatprep.subr.bf16.mxu0 0
    %1178 = vmatpush2.bf16.msra.mxu0 0
    %1179 = vmatprep.subr.bf16.mxu0 0
    %1180 = vmatpush2.bf16.msra.mxu0 0
    %1181 = vmatprep.subr.bf16.mxu0 0
    %1182 = vmatpush2.bf16.msra.mxu0 0
    %1183 = vmatprep.subr.bf16.mxu0 0
    %1184 = vmatpush2.bf16.msra.mxu0 0
    %1185 = vmatprep.subr.bf16.mxu0 0
    %1186 = vmatpush2.bf16.msra.mxu0 0
    %1187 = vmatprep.subr.bf16.mxu0 0
    %1188 = vmatpush2.bf16.msra.mxu0 0
    %1189 = vmatprep.subr.bf16.mxu0 0
    %1190 = vmatpush2.bf16.msra.mxu0 0
    %1191 = vmatprep.mubr.bf16.mxu0 0
    %1192 = vmatmul.mubr.bf16.gmra.mxu0 %v1117
    %v1193 = vpop.f32.mrf.mxu0
    %v1194 = vadd.f32 0.0, %v1193
    %v1195 = vpop.f32.mrf.mxu0
    %v1196 = vpop.f32.mrf.mxu0
    %v1197 = vpop.f32.mrf.mxu0
    %1198 = vdwg.mxu0
    %v1199 = vadd.f32 %v1114, %v1153
    %v1200 = vxor.u32 %v1199, 2147483648
    %v1201 = vmul.f32 %v1200, 1.442695
    %v1202 = vpow.pop %v1201
    %v1203 = vadd.f32 %v1202, 1.0
    %v1204 = vrcp.pop %v1203
    %v1205 = vmul.f32 1.0, %v1204
    %v1206 = vadd.f32 %v1115, %v1155
    %v1207 = vxor.u32 %v1206, 2147483648
    %v1208 = vmul.f32 %v1207, 1.442695
    %v1209 = vpow.pop %v1208
    %v1210 = vadd.f32 %v1209, 1.0
    %v1211 = vrcp.pop %v1210
    %v1212 = vmul.f32 1.0, %v1211
    %v1213 = vadd.f32 %v1194, %v101
    %v1214 = vmul.f32 %v1205, %v1213
    %v1215 = vadd.f32 %v1116, %v1214
    %v1216 = vtanh.pop %v1215
    %v1217 = vsub.f32 1.0, %v1212
    %v1218 = vmul.f32 %v1217, %v1216
    %v1219 = vmul.f32 %v1212, %v1044
    %v1220 = vadd.f32 %v1218, %v1219
    %v1222 = vcombine.high %v1220, %v1220
    %v1224 = vunpack.c.l.s4 1966171168
    %v1225 = vunpack.c.0.s8 %v1224
    %v1226 = vlaneseq
    %v1227 = vshrl.u32 %v1226, 7
    %v1228 = vsub.s32 %v1225, %v1227
    %v1229 = vrot.slane %v1220, %v1228
    %v1231 = vunpack.c.l.s4 1966171168
    %v1232 = vunpack.c.0.s8 %v1231
    %v1233 = vlaneseq
    %v1234 = vshrl.u32 %v1233, 7
    %v1235 = vsub.s32 %v1232, %v1234
    %v1236 = vrot.slane %v1222, %v1235
    %v1237 = vcombine.high %v1229, %v1229
    %v1238 = vcombine.high %v1236, %v1236
    %v1240 = vunpack.c.l.s4 1966171168
    %v1241 = vunpack.c.0.s8 %v1240
    %v1242 = vlaneseq
    %v1243 = vshrl.u32 %v1242, 7
    %v1244 = vsub.s32 %v1241, %v1243
    %v1245 = vrot.slane %v1229, %v1244
    %v1247 = vunpack.c.l.s4 1966171168
    %v1248 = vunpack.c.0.s8 %v1247
    %v1249 = vlaneseq
    %v1250 = vshrl.u32 %v1249, 7
    %v1251 = vsub.s32 %v1248, %v1250
    %v1252 = vrot.slane %v1236, %v1251
    %v1254 = vunpack.c.l.s4 1966171168
    %v1255 = vunpack.c.0.s8 %v1254
    %v1256 = vlaneseq
    %v1257 = vshrl.u32 %v1256, 7
    %v1258 = vsub.s32 %v1255, %v1257
    %v1259 = vrot.slane %v1237, %v1258
    %v1261 = vunpack.c.l.s4 1966171168
    %v1262 = vunpack.c.0.s8 %v1261
    %v1263 = vlaneseq
    %v1264 = vshrl.u32 %v1263, 7
    %v1265 = vsub.s32 %v1262, %v1264
    %v1266 = vrot.slane %v1238, %v1265
    %v1267 = vcombine.high %v1245, %v1245
    %v1268 = vcombine.high %v1252, %v1252
    %v1269 = vcombine.high %v1259, %v1259
    %v1270 = vcombine.high %v1266, %v1266
    %1279 = vst [vmem:[#allocation9 + $0x5] sm:$0x1] %v1245
    %1280 = vst [vmem:[#allocation9 + $0xd] sm:$0x1] %v1259
    %1281 = vst [vmem:[#allocation9 + $0x15] sm:$0x1] %v1267
    %1282 = vst [vmem:[#allocation9 + $0x1d] sm:$0x1] %v1269
    %1283 = vst [vmem:[#allocation9 + $0x25] sm:$0x1] %v1252
    %1284 = vst [vmem:[#allocation9 + $0x2d] sm:$0x1] %v1266
    %1285 = vst [vmem:[#allocation9 + $0x35] sm:$0x1] %v1268
    %1286 = vst [vmem:[#allocation9 + $0x3d] sm:$0x1] %v1270
    %s1287 = scalar_lea.vmem [#allocation3], 72
    %v1288 = vld [vmem:[%s1287] sm:$0xff]
    %v1289 = vld [vmem:[%s1287 + $0x8] sm:$0xf]
    %v1290 = vunpack.c.l.bf16 %v1288
    %v1291 = vunpack.c.h.bf16 %v1288
    %v1292 = vunpack.c.l.bf16 %v1289
    %v1293 = vpack.c.bf16 %v1220, %v1220
    %1294 = vmatprep.subr.bf16.mxu0 %v212
    %1295 = vmatpush1.bf16.msra.mxu0 %v211
    %1296 = vmatprep.subr.bf16.mxu0 %v209
    %1297 = vmatpush1.bf16.msra.mxu0 %v208
    %1298 = vmatprep.subr.bf16.mxu0 %v206
    %1299 = vmatpush1.bf16.msra.mxu0 %v205
    %1300 = vmatprep.subr.bf16.mxu0 %v203
    %1301 = vmatpush1.bf16.msra.mxu0 %v202
    %1302 = vmatprep.subr.bf16.mxu0 %v200
    %1303 = vmatpush1.bf16.msra.mxu0 %v199
    %1304 = vmatprep.subr.bf16.mxu0 %v197
    %1305 = vmatpush1.bf16.msra.mxu0 %v196
    %1306 = vmatprep.subr.bf16.mxu0 %v194
    %1307 = vmatpush1.bf16.msra.mxu0 %v193
    %1308 = vmatprep.subr.bf16.mxu0 %v191
    %1309 = vmatpush1.bf16.msra.mxu0 %v190
    %1310 = vmatprep.subr.bf16.mxu0 0
    %1311 = vmatpush2.bf16.msra.mxu0 0
    %1312 = vmatprep.subr.bf16.mxu0 0
    %1313 = vmatpush2.bf16.msra.mxu0 0
    %1314 = vmatprep.subr.bf16.mxu0 0
    %1315 = vmatpush2.bf16.msra.mxu0 0
    %1316 = vmatprep.subr.bf16.mxu0 0
    %1317 = vmatpush2.bf16.msra.mxu0 0
    %1318 = vmatprep.subr.bf16.mxu0 0
    %1319 = vmatpush2.bf16.msra.mxu0 0
    %1320 = vmatprep.subr.bf16.mxu0 0
    %1321 = vmatpush2.bf16.msra.mxu0 0
    %1322 = vmatprep.subr.bf16.mxu0 0
    %1323 = vmatpush2.bf16.msra.mxu0 0
    %1324 = vmatprep.subr.bf16.mxu0 0
    %1325 = vmatpush2.bf16.msra.mxu0 0
    %1326 = vmatprep.mubr.bf16.mxu0 0
    %1327 = vmatmul.mubr.bf16.gmra.mxu0 %v1293
    %v1328 = vpop.f32.mrf.mxu0
    %v1329 = vadd.f32 0.0, %v1328
    %v1330 = vpop.f32.mrf.mxu0
    %v1331 = vadd.f32 0.0, %v1330
    %v1332 = vpop.f32.mrf.mxu0
    %v1333 = vpop.f32.mrf.mxu0
    %1334 = vdwg.mxu0
    %1335 = vmatprep.subr.bf16.mxu0 0
    %1336 = vmatpush1.bf16.msra.mxu0 %v213
    %1337 = vmatprep.subr.bf16.mxu0 0
    %1338 = vmatpush1.bf16.msra.mxu0 %v210
    %1339 = vmatprep.subr.bf16.mxu0 0
    %1340 = vmatpush1.bf16.msra.mxu0 %v207
    %1341 = vmatprep.subr.bf16.mxu0 0
    %1342 = vmatpush1.bf16.msra.mxu0 %v204
    %1343 = vmatprep.subr.bf16.mxu0 0
    %1344 = vmatpush1.bf16.msra.mxu0 %v201
    %1345 = vmatprep.subr.bf16.mxu0 0
    %1346 = vmatpush1.bf16.msra.mxu0 %v198
    %1347 = vmatprep.subr.bf16.mxu0 0
    %1348 = vmatpush1.bf16.msra.mxu0 %v195
    %1349 = vmatprep.subr.bf16.mxu0 0
    %1350 = vmatpush1.bf16.msra.mxu0 %v192
    %1351 = vmatprep.subr.bf16.mxu0 0
    %1352 = vmatpush2.bf16.msra.mxu0 0
    %1353 = vmatprep.subr.bf16.mxu0 0
    %1354 = vmatpush2.bf16.msra.mxu0 0
    %1355 = vmatprep.subr.bf16.mxu0 0
    %1356 = vmatpush2.bf16.msra.mxu0 0
    %1357 = vmatprep.subr.bf16.mxu0 0
    %1358 = vmatpush2.bf16.msra.mxu0 0
    %1359 = vmatprep.subr.bf16.mxu0 0
    %1360 = vmatpush2.bf16.msra.mxu0 0
    %1361 = vmatprep.subr.bf16.mxu0 0
    %1362 = vmatpush2.bf16.msra.mxu0 0
    %1363 = vmatprep.subr.bf16.mxu0 0
    %1364 = vmatpush2.bf16.msra.mxu0 0
    %1365 = vmatprep.subr.bf16.mxu0 0
    %1366 = vmatpush2.bf16.msra.mxu0 0
    %1367 = vmatprep.mubr.bf16.mxu0 0
    %1368 = vmatmul.mubr.bf16.gmra.mxu0 %v1293
    %v1369 = vpop.f32.mrf.mxu0
    %v1370 = vadd.f32 0.0, %v1369
    %v1371 = vpop.f32.mrf.mxu0
    %v1372 = vpop.f32.mrf.mxu0
    %v1373 = vpop.f32.mrf.mxu0
    %1374 = vdwg.mxu0
    %v1375 = vadd.f32 %v1290, %v1329
    %v1376 = vxor.u32 %v1375, 2147483648
    %v1377 = vmul.f32 %v1376, 1.442695
    %v1378 = vpow.pop %v1377
    %v1379 = vadd.f32 %v1378, 1.0
    %v1380 = vrcp.pop %v1379
    %v1381 = vmul.f32 1.0, %v1380
    %v1382 = vadd.f32 %v1291, %v1331
    %v1383 = vxor.u32 %v1382, 2147483648
    %v1384 = vmul.f32 %v1383, 1.442695
    %v1385 = vpow.pop %v1384
    %v1386 = vadd.f32 %v1385, 1.0
    %v1387 = vrcp.pop %v1386
    %v1388 = vmul.f32 1.0, %v1387
    %v1389 = vadd.f32 %v1370, %v101
    %v1390 = vmul.f32 %v1381, %v1389
    %v1391 = vadd.f32 %v1292, %v1390
    %v1392 = vtanh.pop %v1391
    %v1393 = vsub.f32 1.0, %v1388
    %v1394 = vmul.f32 %v1393, %v1392
    %v1395 = vmul.f32 %v1388, %v1220
    %v1396 = vadd.f32 %v1394, %v1395
    %v1398 = vcombine.high %v1396, %v1396
    %v1400 = vunpack.c.l.s4 1966171168
    %v1401 = vunpack.c.0.s8 %v1400
    %v1402 = vlaneseq
    %v1403 = vshrl.u32 %v1402, 7
    %v1404 = vsub.s32 %v1401, %v1403
    %v1405 = vrot.slane %v1396, %v1404
    %v1407 = vunpack.c.l.s4 1966171168
    %v1408 = vunpack.c.0.s8 %v1407
    %v1409 = vlaneseq
    %v1410 = vshrl.u32 %v1409, 7
    %v1411 = vsub.s32 %v1408, %v1410
    %v1412 = vrot.slane %v1398, %v1411
    %v1413 = vcombine.high %v1405, %v1405
    %v1414 = vcombine.high %v1412, %v1412
    %v1416 = vunpack.c.l.s4 1966171168
    %v1417 = vunpack.c.0.s8 %v1416
    %v1418 = vlaneseq
    %v1419 = vshrl.u32 %v1418, 7
    %v1420 = vsub.s32 %v1417, %v1419
    %v1421 = vrot.slane %v1405, %v1420
    %v1423 = vunpack.c.l.s4 1966171168
    %v1424 = vunpack.c.0.s8 %v1423
    %v1425 = vlaneseq
    %v1426 = vshrl.u32 %v1425, 7
    %v1427 = vsub.s32 %v1424, %v1426
    %v1428 = vrot.slane %v1412, %v1427
    %v1430 = vunpack.c.l.s4 1966171168
    %v1431 = vunpack.c.0.s8 %v1430
    %v1432 = vlaneseq
    %v1433 = vshrl.u32 %v1432, 7
    %v1434 = vsub.s32 %v1431, %v1433
    %v1435 = vrot.slane %v1413, %v1434
    %v1437 = vunpack.c.l.s4 1966171168
    %v1438 = vunpack.c.0.s8 %v1437
    %v1439 = vlaneseq
    %v1440 = vshrl.u32 %v1439, 7
    %v1441 = vsub.s32 %v1438, %v1440
    %v1442 = vrot.slane %v1414, %v1441
    %v1443 = vcombine.high %v1421, %v1421
    %v1444 = vcombine.high %v1428, %v1428
    %v1445 = vcombine.high %v1435, %v1435
    %v1446 = vcombine.high %v1442, %v1442
    %1455 = vst [vmem:[#allocation9 + $0x6] sm:$0x1] %v1421
    %1456 = vst [vmem:[#allocation9 + $0xe] sm:$0x1] %v1435
    %1457 = vst [vmem:[#allocation9 + $0x16] sm:$0x1] %v1443
    %1458 = vst [vmem:[#allocation9 + $0x1e] sm:$0x1] %v1445
    %1459 = vst [vmem:[#allocation9 + $0x26] sm:$0x1] %v1428
    %1460 = vst [vmem:[#allocation9 + $0x2e] sm:$0x1] %v1442
    %1461 = vst [vmem:[#allocation9 + $0x36] sm:$0x1] %v1444
    %1462 = vst [vmem:[#allocation9 + $0x3e] sm:$0x1] %v1446
    %s1463 = scalar_lea.vmem [#allocation3], 84
    %v1464 = vld [vmem:[%s1463] sm:$0xff]
    %v1465 = vld [vmem:[%s1463 + $0x8] sm:$0xf]
    %v1466 = vunpack.c.l.bf16 %v1464
    %v1467 = vunpack.c.h.bf16 %v1464
    %v1468 = vunpack.c.l.bf16 %v1465
    %v1469 = vpack.c.bf16 %v1396, %v1396
    %1470 = vmatprep.subr.bf16.mxu0 %v212
    %1471 = vmatpush1.bf16.msra.mxu0 %v211
    %1472 = vmatprep.subr.bf16.mxu0 %v209
    %1473 = vmatpush1.bf16.msra.mxu0 %v208
    %1474 = vmatprep.subr.bf16.mxu0 %v206
    %1475 = vmatpush1.bf16.msra.mxu0 %v205
    %1476 = vmatprep.subr.bf16.mxu0 %v203
    %1477 = vmatpush1.bf16.msra.mxu0 %v202
    %1478 = vmatprep.subr.bf16.mxu0 %v200
    %1479 = vmatpush1.bf16.msra.mxu0 %v199
    %1480 = vmatprep.subr.bf16.mxu0 %v197
    %1481 = vmatpush1.bf16.msra.mxu0 %v196
    %1482 = vmatprep.subr.bf16.mxu0 %v194
    %1483 = vmatpush1.bf16.msra.mxu0 %v193
    %1484 = vmatprep.subr.bf16.mxu0 %v191
    %1485 = vmatpush1.bf16.msra.mxu0 %v190
    %1486 = vmatprep.subr.bf16.mxu0 0
    %1487 = vmatpush2.bf16.msra.mxu0 0
    %1488 = vmatprep.subr.bf16.mxu0 0
    %1489 = vmatpush2.bf16.msra.mxu0 0
    %1490 = vmatprep.subr.bf16.mxu0 0
    %1491 = vmatpush2.bf16.msra.mxu0 0
    %1492 = vmatprep.subr.bf16.mxu0 0
    %1493 = vmatpush2.bf16.msra.mxu0 0
    %1494 = vmatprep.subr.bf16.mxu0 0
    %1495 = vmatpush2.bf16.msra.mxu0 0
    %1496 = vmatprep.subr.bf16.mxu0 0
    %1497 = vmatpush2.bf16.msra.mxu0 0
    %1498 = vmatprep.subr.bf16.mxu0 0
    %1499 = vmatpush2.bf16.msra.mxu0 0
    %1500 = vmatprep.subr.bf16.mxu0 0
    %1501 = vmatpush2.bf16.msra.mxu0 0
    %1502 = vmatprep.mubr.bf16.mxu0 0
    %1503 = vmatmul.mubr.bf16.gmra.mxu0 %v1469
    %v1504 = vpop.f32.mrf.mxu0
    %v1505 = vadd.f32 0.0, %v1504
    %v1506 = vpop.f32.mrf.mxu0
    %v1507 = vadd.f32 0.0, %v1506
    %v1508 = vpop.f32.mrf.mxu0
    %v1509 = vpop.f32.mrf.mxu0
    %1510 = vdwg.mxu0
    %1511 = vmatprep.subr.bf16.mxu0 0
    %1512 = vmatpush1.bf16.msra.mxu0 %v213
    %1513 = vmatprep.subr.bf16.mxu0 0
    %1514 = vmatpush1.bf16.msra.mxu0 %v210
    %1515 = vmatprep.subr.bf16.mxu0 0
    %1516 = vmatpush1.bf16.msra.mxu0 %v207
    %1517 = vmatprep.subr.bf16.mxu0 0
    %1518 = vmatpush1.bf16.msra.mxu0 %v204
    %1519 = vmatprep.subr.bf16.mxu0 0
    %1520 = vmatpush1.bf16.msra.mxu0 %v201
    %1521 = vmatprep.subr.bf16.mxu0 0
    %1522 = vmatpush1.bf16.msra.mxu0 %v198
    %1523 = vmatprep.subr.bf16.mxu0 0
    %1524 = vmatpush1.bf16.msra.mxu0 %v195
    %1525 = vmatprep.subr.bf16.mxu0 0
    %1526 = vmatpush1.bf16.msra.mxu0 %v192
    %1527 = vmatprep.subr.bf16.mxu0 0
    %1528 = vmatpush2.bf16.msra.mxu0 0
    %1529 = vmatprep.subr.bf16.mxu0 0
    %1530 = vmatpush2.bf16.msra.mxu0 0
    %1531 = vmatprep.subr.bf16.mxu0 0
    %1532 = vmatpush2.bf16.msra.mxu0 0
    %1533 = vmatprep.subr.bf16.mxu0 0
    %1534 = vmatpush2.bf16.msra.mxu0 0
    %1535 = vmatprep.subr.bf16.mxu0 0
    %1536 = vmatpush2.bf16.msra.mxu0 0
    %1537 = vmatprep.subr.bf16.mxu0 0
    %1538 = vmatpush2.bf16.msra.mxu0 0
    %1539 = vmatprep.subr.bf16.mxu0 0
    %1540 = vmatpush2.bf16.msra.mxu0 0
    %1541 = vmatprep.subr.bf16.mxu0 0
    %1542 = vmatpush2.bf16.msra.mxu0 0
    %1543 = vmatprep.mubr.bf16.mxu0 0
    %1544 = vmatmul.mubr.bf16.gmra.mxu0 %v1469
    %v1545 = vpop.f32.mrf.mxu0
    %v1546 = vadd.f32 0.0, %v1545
    %v1547 = vpop.f32.mrf.mxu0
    %v1548 = vpop.f32.mrf.mxu0
    %v1549 = vpop.f32.mrf.mxu0
    %1550 = vdwg.mxu0
    %v1551 = vadd.f32 %v1466, %v1505
    %v1552 = vxor.u32 %v1551, 2147483648
    %v1553 = vmul.f32 %v1552, 1.442695
    %v1554 = vpow.pop %v1553
    %v1555 = vadd.f32 %v1554, 1.0
    %v1556 = vrcp.pop %v1555
    %v1557 = vmul.f32 1.0, %v1556
    %v1558 = vadd.f32 %v1467, %v1507
    %v1559 = vxor.u32 %v1558, 2147483648
    %v1560 = vmul.f32 %v1559, 1.442695
    %v1561 = vpow.pop %v1560
    %v1562 = vadd.f32 %v1561, 1.0
    %v1563 = vrcp.pop %v1562
    %v1564 = vmul.f32 1.0, %v1563
    %v1565 = vadd.f32 %v1546, %v101
    %v1566 = vmul.f32 %v1557, %v1565
    %v1567 = vadd.f32 %v1468, %v1566
    %v1568 = vtanh.pop %v1567
    %v1569 = vsub.f32 1.0, %v1564
    %v1570 = vmul.f32 %v1569, %v1568
    %v1571 = vmul.f32 %v1564, %v1396
    %v1572 = vadd.f32 %v1570, %v1571
    %v1574 = vcombine.high %v1572, %v1572
    %v1576 = vunpack.c.l.s4 1966171168
    %v1577 = vunpack.c.0.s8 %v1576
    %v1578 = vlaneseq
    %v1579 = vshrl.u32 %v1578, 7
    %v1580 = vsub.s32 %v1577, %v1579
    %v1581 = vrot.slane %v1572, %v1580
    %v1583 = vunpack.c.l.s4 1966171168
    %v1584 = vunpack.c.0.s8 %v1583
    %v1585 = vlaneseq
    %v1586 = vshrl.u32 %v1585, 7
    %v1587 = vsub.s32 %v1584, %v1586
    %v1588 = vrot.slane %v1574, %v1587
    %v1589 = vcombine.high %v1581, %v1581
    %v1590 = vcombine.high %v1588, %v1588
    %v1592 = vunpack.c.l.s4 1966171168
    %v1593 = vunpack.c.0.s8 %v1592
    %v1594 = vlaneseq
    %v1595 = vshrl.u32 %v1594, 7
    %v1596 = vsub.s32 %v1593, %v1595
    %v1597 = vrot.slane %v1581, %v1596
    %v1599 = vunpack.c.l.s4 1966171168
    %v1600 = vunpack.c.0.s8 %v1599
    %v1601 = vlaneseq
    %v1602 = vshrl.u32 %v1601, 7
    %v1603 = vsub.s32 %v1600, %v1602
    %v1604 = vrot.slane %v1588, %v1603
    %v1606 = vunpack.c.l.s4 1966171168
    %v1607 = vunpack.c.0.s8 %v1606
    %v1608 = vlaneseq
    %v1609 = vshrl.u32 %v1608, 7
    %v1610 = vsub.s32 %v1607, %v1609
    %v1611 = vrot.slane %v1589, %v1610
    %v1613 = vunpack.c.l.s4 1966171168
    %v1614 = vunpack.c.0.s8 %v1613
    %v1615 = vlaneseq
    %v1616 = vshrl.u32 %v1615, 7
    %v1617 = vsub.s32 %v1614, %v1616
    %v1618 = vrot.slane %v1590, %v1617
    %v1619 = vcombine.high %v1597, %v1597
    %v1620 = vcombine.high %v1604, %v1604
    %v1621 = vcombine.high %v1611, %v1611
    %v1622 = vcombine.high %v1618, %v1618
    %1631 = vst [vmem:[#allocation9 + $0x7] sm:$0x1] %v1597
    %1632 = vst [vmem:[#allocation9 + $0xf] sm:$0x1] %v1611
    %1633 = vst [vmem:[#allocation9 + $0x17] sm:$0x1] %v1619
    %1634 = vst [vmem:[#allocation9 + $0x1f] sm:$0x1] %v1621
    %1635 = vst [vmem:[#allocation9 + $0x27] sm:$0x1] %v1604
    %1636 = vst [vmem:[#allocation9 + $0x2f] sm:$0x1] %v1618
    %1637 = vst [vmem:[#allocation9 + $0x37] sm:$0x1] %v1620
    %1638 = vst [vmem:[#allocation9 + $0x3f] sm:$0x1] %v1622
    %1639 = vst [vmem:[#allocation2] sm:$0xff] %v1572
    // Predicated region
    $region34: #{tpu_custom_call.1} parent=1 // pred_check
      _
    $region35: #{tpu_custom_call.1} parent=1 // pred_check_branch
      %1641 = sbr.rel (0) target = $region37
    $region36: #{tpu_custom_call.1} parent=1 // pred_region
      %s1643 = ssub.s32 1024, 1024
      %1644 = vsyncadd [#allocation5], %s1643
      %s1645 = sshll.u32 [#allocation9], 4
      %s1646 = int_to_ptr.vmem [resolvable:$true] %s1645
      %1651 = dma.vmem_to_hbm [thread:$0]  %s1646, 1024, %s4, [#allocation5], 128, 128, 8
    $region37: #{tpu_custom_call.1} parent=1 // pred_fallthru
      _
    // Predicated region
    $region38: #{tpu_custom_call.1} parent=1 // pred_check
      _
    $region39: #{tpu_custom_call.1} parent=1 // pred_check_branch
      %1653 = sbr.rel (0) target = $region41
    $region40: #{tpu_custom_call.1} parent=1 // pred_region
      %1654 = dma.done [#allocation5], 1024
    $region41: #{tpu_custom_call.1} parent=1 // pred_fallthru
      _
    %1655 = vsyncpa [#allocation4], 1
    %1656 = vsyncpa [#allocation7], 1
    %1657 = vsyncpa [#allocation5], 1

</llo_original>
